<compile_context>
chip_gen: v7x
topology: tpu7x:2x2x1
jax: 0.10.0
libtpu: 0.0.40
codegen_flags: <defaults>
</compile_context>

<pallas_src>
import functools

import jax
import jax.numpy as jnp
from jax.experimental import pallas as pl
from jax.experimental.pallas import tpu as pltpu

EPS = 1e-12                       # module eps (norm / d_norm_sq regularizers)
BN_EPS = 1e-5                     # nn.BatchNorm default eps
NEG_SLOPE = 0.2                   # module default negative_slope
MAX_TILE_S = 2048                 # hard cap on lanes per grid step
TILE_BUDGET = 10 * 1024 * 1024    # VMEM budget used when auto-sizing the S tile
VMEM_LIMIT = 32 * 1024 * 1024     # scoped-vmem limit, safe on v5e / v6e / v7x


def _expand_weight(w):
    """[O, C_in] -> [3*O, 3*C_in] with row v*O+o, col c*3+v equal to w[o, c].

    Lets a single MXU matmul against x laid out as [3*C_in, S] (row c*3+v)
    produce all three vector components of the linear map at once.
    """
    eye3 = jnp.eye(3, dtype=w.dtype)
    wb = w[None, :, :, None] * eye3[:, None, None, :]          # [3, O, C_in, 3]
    return wb.reshape(3 * w.shape[0], 3 * w.shape[1])


def _choose_tile_s(s_total, c_in, c_out, c_dir):
    """Largest lane-dense S tile that keeps the pipelined blocks under TILE_BUDGET."""
    # Per-lane f32 bytes in the (bigger) apply pass:
    #   2x double-buffered input rows (3*C_in)
    #   2x double-buffered output rows (C_out groups, 3 sublanes padded to 8)
    #   matmul result rows 3*(C_out+C_dir) plus ~6*C_out rows of elementwise temps.
    per_lane = 4 * (2 * 3 * c_in + 2 * 8 * c_out + 3 * (c_out + c_dir) + 6 * c_out)
    max_lanes = max(128, min(MAX_TILE_S, (TILE_BUDGET // per_lane) // 128 * 128))
    # If the whole S dim fits, use it (block == full dim sidesteps the 128 constraint).
    return s_total if s_total <= max_lanes else max_lanes


def _stats_kernel(x_ref, wf_ref, sum_ref, ssq_ref, *, c_out, tile_s, s_total, ragged):
    """Pass 1: accumulate per-channel sum / sum-of-squares of ||p|| over B and S."""
    b = pl.program_id(0)
    s = pl.program_id(1)

    @pl.when(jnp.logical_and(b == 0, s == 0))
    def _init():
        sum_ref[...] = jnp.zeros_like(sum_ref)
        ssq_ref[...] = jnp.zeros_like(ssq_ref)

    xb = x_ref[0]                                                      # [3*C_in, TILE]
    p = jnp.dot(wf_ref[...], xb, preferred_element_type=jnp.float32)  # [3*C_out, TILE]
    p0 = p[0 * c_out:1 * c_out, :]
    p1 = p[1 * c_out:2 * c_out, :]
    p2 = p[2 * c_out:3 * c_out, :]
    norm = jnp.sqrt(p0 * p0 + p1 * p1 + p2 * p2) + EPS                 # [C_out, TILE]

    if ragged:
        # Mask padded lanes of the ragged last tile so they don't pollute BN stats.
        lane = jax.lax.broadcasted_iota(jnp.int32, norm.shape, 1)
        valid = (s * tile_s + lane) < s_total
        norm = jnp.where(valid, norm, 0.0)

    sum_ref[...] += jnp.sum(norm, axis=1, keepdims=True)
    ssq_ref[...] += jnp.sum(norm * norm, axis=1, keepdims=True)


def _apply_kernel(x_ref, w_ref, bn_ref, o_ref, *, c_out, c_dir):
    """Pass 2: recompute p/d, apply BN rescale and the vector leaky-relu."""
    xb = x_ref[0]                                                      # [3*C_in, TILE]
    pd = jnp.dot(w_ref[...], xb, preferred_element_type=jnp.float32)  # [3*(Co+Cd), TILE]

    p0 = pd[0 * c_out:1 * c_out, :]
    p1 = pd[1 * c_out:2 * c_out, :]
    p2 = pd[2 * c_out:3 * c_out, :]
    off = 3 * c_out
    d0 = pd[off + 0 * c_dir:off + 1 * c_dir, :]
    d1 = pd[off + 1 * c_dir:off + 2 * c_dir, :]
    d2 = pd[off + 2 * c_dir:off + 3 * c_dir, :]

    inv_std = bn_ref[0]        # [C_out, 1]  = rsqrt(var + BN_EPS)
    mean_sc = bn_ref[1]        # [C_out, 1]  = mean * inv_std

    norm = jnp.sqrt(p0 * p0 + p1 * p1 + p2 * p2) + EPS
    # scale == (norm - mean) * inv_std / norm, with per-channel constants hoisted.
    scale = inv_std - mean_sc / norm
    q0 = p0 * scale
    q1 = p1 * scale
    q2 = p2 * scale

    dotprod = q0 * d0 + q1 * d1 + q2 * d2
    d_norm_sq = d0 * d0 + d1 * d1 + d2 * d2
    coef = dotprod / (d_norm_sq + EPS)
    c = (1.0 - NEG_SLOPE) * jnp.minimum(coef, 0.0)

    o_ref[0, :, 0, :] = q0 - c * d0
    o_ref[0, :, 1, :] = q1 - c * d1
    o_ref[0, :, 2, :] = q2 - c * d2


@jax.jit
def vn_linear_leakyrelu(x, w_feat, w_dir):
    """x: [B, C_in, 3, N, K] f32 -> [B, C_out, 3, N, K] f32."""
    B, C_in, V, N, K = x.shape
    assert V == 3
    C_out = w_feat.shape[0]
    C_dir = w_dir.shape[0]
    S = N * K

    tile_s = _choose_tile_s(S, C_in, C_out, C_dir)
    nt = pl.cdiv(S, tile_s)
    ragged = (S % tile_s) != 0

    # Free reshape (adjacent-dim merge) -- no HBM transpose anywhere.
    x_r = x.reshape(B, C_in * 3, S)

    wf_big = _expand_weight(w_feat)                        # [3*C_out, 3*C_in]
    wd_big = _expand_weight(w_dir)                         # [3*C_dir, 3*C_in]
    w_all = jnp.concatenate([wf_big, wd_big], axis=0)      # [3*(C_out+C_dir), 3*C_in]

    # ---------------- pass 1: BN statistics of ||p|| over (B, N, K) ----------------
    stats_kernel = functools.partial(
        _stats_kernel, c_out=C_out, tile_s=tile_s, s_total=S, ragged=ragged)
    psum, pssq = pl.pallas_call(
        stats_kernel,
        grid=(B, nt),
        in_specs=[
            pl.BlockSpec((1, C_in * 3, tile_s), lambda b, s: (b, 0, s)),
            pl.BlockSpec((3 * C_out, 3 * C_in), lambda b, s: (0, 0)),
        ],
        out_specs=[
            pl.BlockSpec((C_out, 1), lambda b, s: (0, 0)),
            pl.BlockSpec((C_out, 1), lambda b, s: (0, 0)),
        ],
        out_shape=[
            jax.ShapeDtypeStruct((C_out, 1), jnp.float32),
            jax.ShapeDtypeStruct((C_out, 1), jnp.float32),
        ],
        compiler_params=pltpu.CompilerParams(
            dimension_semantics=("arbitrary", "arbitrary"),
            vmem_limit_bytes=VMEM_LIMIT,
        ),
    )(x_r, wf_big)

    # Training-mode BatchNorm batch stats (biased variance), gamma=1, beta=0.
    # TODO(synk): running_mean/running_var buffer updates of nn.BatchNorm are
    # stateful training bookkeeping and are not reproduced here.
    # TODO(synk): var via E[x^2]-E[x]^2 can lose precision for tiny-variance
    # channels; a shifted/Welford accumulation would be more robust.
    inv_count = 1.0 / float(B * S)
    mean = psum * inv_count
    var = jnp.maximum(pssq * inv_count - mean * mean, 0.0)
    inv_std = jax.lax.rsqrt(var + BN_EPS)
    bn_ab = jnp.stack([inv_std, mean * inv_std], axis=0)   # [2, C_out, 1]

    # ---------------- pass 2: apply BN rescale + vector leaky-relu ----------------
    apply_kernel = functools.partial(_apply_kernel, c_out=C_out, c_dir=C_dir)
    out = pl.pallas_call(
        apply_kernel,
        grid=(B, nt),
        in_specs=[
            pl.BlockSpec((1, C_in * 3, tile_s), lambda b, s: (b, 0, s)),
            pl.BlockSpec((3 * (C_out + C_dir), 3 * C_in), lambda b, s: (0, 0)),
            pl.BlockSpec((2, C_out, 1), lambda b, s: (0, 0, 0)),
        ],
        out_specs=pl.BlockSpec((1, C_out, 3, tile_s), lambda b, s: (b, 0, 0, s)),
        out_shape=jax.ShapeDtypeStruct((B, C_out, 3, S), jnp.float32),
        compiler_params=pltpu.CompilerParams(
            dimension_semantics=("parallel", "parallel"),
            vmem_limit_bytes=VMEM_LIMIT,
        ),
    )(x_r, w_all, bn_ab)

    # Free reshape (split of the last dim) back to the module's output layout.
    return out.reshape(B, C_out, 3, N, K)


def ref_forward(x, w_feat, w_dir):
    """Pure-JAX transcription of the PyTorch forward (training-mode BN)."""
    p = jnp.einsum("oi,bivnk->bovnk", w_feat, x)
    d = jnp.einsum("oi,bivnk->bovnk", w_dir, x)

    norm = jnp.sqrt(jnp.sum(p * p, axis=2)) + EPS            # [B, Co, N, K]
    mean = jnp.mean(norm, axis=(0, 2, 3), keepdims=True)
    var = jnp.mean((norm - mean) ** 2, axis=(0, 2, 3), keepdims=True)
    norm_bn = (norm - mean) / jnp.sqrt(var + BN_EPS)
    p = p / norm[:, :, None] * norm_bn[:, :, None]

    dotprod = jnp.sum(p * d, axis=2, keepdims=True)
    mask = (dotprod >= 0).astype(p.dtype)
    d_norm_sq = jnp.sum(d * d, axis=2, keepdims=True)
    return NEG_SLOPE * p + (1 - NEG_SLOPE) * (
        mask * p + (1 - mask) * (p - dotprod / (d_norm_sq + EPS) * d)
    )


if __name__ == "__main__":
    # S = N*K = 1024 -> a single lane-dense 1024-wide S tile per batch element.
    B, C_in, C_out, N, K = 2, 4, 8, 32, 32

    key = jax.random.PRNGKey(0)
    kx, kf, kd = jax.random.split(key, 3)

    x = jax.random.normal(kx, (B, C_in, 3, N, K), dtype=jnp.float32)

    # Deterministic nn.Linear-style init: U(-1/sqrt(C_in), 1/sqrt(C_in)).
    bound = 1.0 / (C_in ** 0.5)
    w_feat = jax.random.uniform(kf, (C_out, C_in), jnp.float32, -bound, bound)
    w_dir = jax.random.uniform(kd, (C_out, C_in), jnp.float32, -bound, bound)

    out = jax.block_until_ready(vn_linear_leakyrelu(x, w_feat, w_dir))
    ref = ref_forward(x, w_feat, w_dir)

    assert out.shape == (B, C_out, 3, N, K)
    max_err = jnp.max(jnp.abs(out - ref))
    assert jnp.allclose(out, ref, rtol=1e-4, atol=1e-5), f"max abs err = {max_err}"

    print("KERNEL_OK")
</pallas_src>

<mosaic_0001>
module attributes {stable_mosaic.version = 11 : i64} {
  func.func @_stats_kernel(%arg0: i32, %arg1: i32, %arg2: memref<1x12x1024xf32, #tpu.memory_space<vmem>>, %arg3: memref<24x12xf32, #tpu.memory_space<vmem>>, %arg4: memref<8x1xf32, #tpu.memory_space<vmem>>, %arg5: memref<8x1xf32, #tpu.memory_space<vmem>>) attributes {dimension_semantics = [#tpu.dimension_semantics<arbitrary>, #tpu.dimension_semantics<arbitrary>], iteration_bounds = array<i64: 2, 1>, scalar_prefetch = 0 : i64, scratch_operands = 0 : i64, tpu.core_type = #tpu.core_type<tc>, window_params = [{transform_indices = @transform_0, window_bounds = array<i64: 1, 12, 1024>}, {pipeline_mode = #tpu.pipeline_mode<synchronous>, transform_indices = @transform_1, window_bounds = array<i64: 24, 12>}, {pipeline_mode = #tpu.pipeline_mode<synchronous>, transform_indices = @transform_2, window_bounds = array<i64: 8, 1>}, {pipeline_mode = #tpu.pipeline_mode<synchronous>, transform_indices = @transform_3, window_bounds = array<i64: 8, 1>}]} {
    %c0_i32 = arith.constant 0 : i32
    %0 = arith.cmpi eq, %arg0, %c0_i32 : i32
    %c0_i32_0 = arith.constant 0 : i32
    %1 = arith.cmpi eq, %arg1, %c0_i32_0 : i32
    %2 = arith.andi %0, %1 : i1
    %3 = arith.extui %2 : i1 to i32
    %c0_i32_1 = arith.constant 0 : i32
    %4 = arith.cmpi ne, %3, %c0_i32_1 : i32
    scf.if %4 {
      %cst_17 = arith.constant 0.000000e+00 : f32
      %31 = vector.broadcast %cst_17 : f32 to vector<8x1xf32>
      %c0_18 = arith.constant 0 : index
      %c0_19 = arith.constant 0 : index
      %32 = vector.load %arg4[%c0_18, %c0_19] : memref<8x1xf32, #tpu.memory_space<vmem>>, vector<8x1xf32>
      tpu.vector_store %arg4[%c0_18, %c0_19], %31 {strides = array<i32>} : memref<8x1xf32, #tpu.memory_space<vmem>>, vector<8x1xf32>,
      %cst_20 = arith.constant 0.000000e+00 : f32
      %33 = vector.broadcast %cst_20 : f32 to vector<8x1xf32>
      %c0_21 = arith.constant 0 : index
      %c0_22 = arith.constant 0 : index
      %34 = vector.load %arg5[%c0_21, %c0_22] : memref<8x1xf32, #tpu.memory_space<vmem>>, vector<8x1xf32>
      tpu.vector_store %arg5[%c0_21, %c0_22], %33 {strides = array<i32>} : memref<8x1xf32, #tpu.memory_space<vmem>>, vector<8x1xf32>,
    } else {
    }
    %c0 = arith.constant 0 : index
    %c0_2 = arith.constant 0 : index
    %c0_3 = arith.constant 0 : index
    %5 = vector.load %arg2[%c0, %c0_2, %c0_3] : memref<1x12x1024xf32, #tpu.memory_space<vmem>>, vector<1x12x1024xf32>
    %6 = vector.shape_cast %5 : vector<1x12x1024xf32> to vector<12x1024xf32>
    %c0_4 = arith.constant 0 : index
    %c0_5 = arith.constant 0 : index
    %7 = vector.load %arg3[%c0_4, %c0_5] : memref<24x12xf32, #tpu.memory_space<vmem>>, vector<24x12xf32>
    %cst = arith.constant dense<0.000000e+00> : vector<24x1024xf32>
    %8 = tpu.matmul %7, %6, %cst {dimension_numbers = #tpu.dot_dimension_numbers<[1], [0], [0], [1], [0, 0, 1, 1], [], []>} : vector<24x12xf32>, vector<12x1024xf32>, vector<24x1024xf32> -> vector<24x1024xf32>
    %9 = vector.extract_strided_slice %8 {offsets = [0, 0], sizes = [8, 1024], strides = [1, 1]} : vector<24x1024xf32> to vector<8x1024xf32>
    %10 = vector.extract_strided_slice %8 {offsets = [8, 0], sizes = [8, 1024], strides = [1, 1]} : vector<24x1024xf32> to vector<8x1024xf32>
    %11 = vector.extract_strided_slice %8 {offsets = [16, 0], sizes = [8, 1024], strides = [1, 1]} : vector<24x1024xf32> to vector<8x1024xf32>
    %12 = arith.mulf %9, %9 : vector<8x1024xf32>
    %13 = arith.mulf %10, %10 : vector<8x1024xf32>
    %14 = arith.addf %12, %13 : vector<8x1024xf32>
    %15 = arith.mulf %11, %11 : vector<8x1024xf32>
    %16 = arith.addf %14, %15 : vector<8x1024xf32>
    %17 = math.sqrt %16 : vector<8x1024xf32>
    %cst_6 = arith.constant 9.99999996E-13 : f32
    %18 = vector.broadcast %cst_6 : f32 to vector<8x1024xf32>
    %19 = arith.addf %17, %18 : vector<8x1024xf32>
    %c0_7 = arith.constant 0 : index
    %c0_8 = arith.constant 0 : index
    %20 = vector.load %arg4[%c0_7, %c0_8] : memref<8x1xf32, #tpu.memory_space<vmem>>, vector<8x1xf32>
    %cst_9 = arith.constant dense<0.000000e+00> : vector<8xf32>
    %21 = vector.multi_reduction <add>, %19, %cst_9 [1] : vector<8x1024xf32> to vector<8xf32>
    %22 = vector.shape_cast %21 : vector<8xf32> to vector<8x1xf32>
    %23 = arith.addf %20, %22 : vector<8x1xf32>
    %c0_10 = arith.constant 0 : index
    %c0_11 = arith.constant 0 : index
    %24 = vector.load %arg4[%c0_10, %c0_11] : memref<8x1xf32, #tpu.memory_space<vmem>>, vector<8x1xf32>
    tpu.vector_store %arg4[%c0_10, %c0_11], %23 {strides = array<i32>} : memref<8x1xf32, #tpu.memory_space<vmem>>, vector<8x1xf32>,
    %c0_12 = arith.constant 0 : index
    %c0_13 = arith.constant 0 : index
    %25 = vector.load %arg5[%c0_12, %c0_13] : memref<8x1xf32, #tpu.memory_space<vmem>>, vector<8x1xf32>
    %26 = arith.mulf %19, %19 : vector<8x1024xf32>
    %cst_14 = arith.constant dense<0.000000e+00> : vector<8xf32>
    %27 = vector.multi_reduction <add>, %26, %cst_14 [1] : vector<8x1024xf32> to vector<8xf32>
    %28 = vector.shape_cast %27 : vector<8xf32> to vector<8x1xf32>
    %29 = arith.addf %25, %28 : vector<8x1xf32>
    %c0_15 = arith.constant 0 : index
    %c0_16 = arith.constant 0 : index
    %30 = vector.load %arg5[%c0_15, %c0_16] : memref<8x1xf32, #tpu.memory_space<vmem>>, vector<8x1xf32>
    tpu.vector_store %arg5[%c0_15, %c0_16], %29 {strides = array<i32>} : memref<8x1xf32, #tpu.memory_space<vmem>>, vector<8x1xf32>,
    return
  }
  func.func @transform_0(%arg0: i32, %arg1: i32) -> (i32, i32, i32) {
    %c0_i32 = arith.constant 0 : i32
    %c0_i32_0 = arith.constant 0 : i32
    return %arg0, %c0_i32, %arg1 : i32, i32, i32
  }
  func.func @transform_1(%arg0: i32, %arg1: i32) -> (i32, i32) {
    %c0_i32 = arith.constant 0 : i32
    %c0_i32_0 = arith.constant 0 : i32
    %c0_i32_1 = arith.constant 0 : i32
    return %c0_i32, %c0_i32_0 : i32, i32
  }
  func.func @transform_2(%arg0: i32, %arg1: i32) -> (i32, i32) {
    %c0_i32 = arith.constant 0 : i32
    %c0_i32_0 = arith.constant 0 : i32
    %c0_i32_1 = arith.constant 0 : i32
    return %c0_i32, %c0_i32_0 : i32, i32
  }
  func.func @transform_3(%arg0: i32, %arg1: i32) -> (i32, i32) {
    %c0_i32 = arith.constant 0 : i32
    %c0_i32_0 = arith.constant 0 : i32
    %c0_i32_1 = arith.constant 0 : i32
    return %c0_i32, %c0_i32_0 : i32, i32
  }
}

module attributes {stable_mosaic.version = 11 : i64} {
  func.func @_apply_kernel(%arg0: i32, %arg1: i32, %arg2: memref<1x12x1024xf32, #tpu.memory_space<vmem>>, %arg3: memref<48x12xf32, #tpu.memory_space<vmem>>, %arg4: memref<2x8x1xf32, #tpu.memory_space<vmem>>, %arg5: memref<1x8x3x1024xf32, #tpu.memory_space<vmem>>) attributes {dimension_semantics = [#tpu.dimension_semantics<parallel>, #tpu.dimension_semantics<parallel>], iteration_bounds = array<i64: 2, 1>, scalar_prefetch = 0 : i64, scratch_operands = 0 : i64, tpu.core_type = #tpu.core_type<tc>, window_params = [{transform_indices = @transform_0, window_bounds = array<i64: 1, 12, 1024>}, {pipeline_mode = #tpu.pipeline_mode<synchronous>, transform_indices = @transform_1, window_bounds = array<i64: 48, 12>}, {pipeline_mode = #tpu.pipeline_mode<synchronous>, transform_indices = @transform_2, window_bounds = array<i64: 2, 8, 1>}, {transform_indices = @transform_3, window_bounds = array<i64: 1, 8, 3, 1024>}]} {
    %c0 = arith.constant 0 : index
    %c0_0 = arith.constant 0 : index
    %c0_1 = arith.constant 0 : index
    %0 = vector.load %arg2[%c0, %c0_0, %c0_1] : memref<1x12x1024xf32, #tpu.memory_space<vmem>>, vector<1x12x1024xf32>
    %1 = vector.shape_cast %0 : vector<1x12x1024xf32> to vector<12x1024xf32>
    %c0_2 = arith.constant 0 : index
    %c0_3 = arith.constant 0 : index
    %2 = vector.load %arg3[%c0_2, %c0_3] : memref<48x12xf32, #tpu.memory_space<vmem>>, vector<48x12xf32>
    %cst = arith.constant dense<0.000000e+00> : vector<48x1024xf32>
    %3 = tpu.matmul %2, %1, %cst {dimension_numbers = #tpu.dot_dimension_numbers<[1], [0], [0], [1], [0, 0, 1, 1], [], []>} : vector<48x12xf32>, vector<12x1024xf32>, vector<48x1024xf32> -> vector<48x1024xf32>
    %4 = vector.extract_strided_slice %3 {offsets = [0, 0], sizes = [8, 1024], strides = [1, 1]} : vector<48x1024xf32> to vector<8x1024xf32>
    %5 = vector.extract_strided_slice %3 {offsets = [8, 0], sizes = [8, 1024], strides = [1, 1]} : vector<48x1024xf32> to vector<8x1024xf32>
    %6 = vector.extract_strided_slice %3 {offsets = [16, 0], sizes = [8, 1024], strides = [1, 1]} : vector<48x1024xf32> to vector<8x1024xf32>
    %7 = vector.extract_strided_slice %3 {offsets = [24, 0], sizes = [8, 1024], strides = [1, 1]} : vector<48x1024xf32> to vector<8x1024xf32>
    %8 = vector.extract_strided_slice %3 {offsets = [32, 0], sizes = [8, 1024], strides = [1, 1]} : vector<48x1024xf32> to vector<8x1024xf32>
    %9 = vector.extract_strided_slice %3 {offsets = [40, 0], sizes = [8, 1024], strides = [1, 1]} : vector<48x1024xf32> to vector<8x1024xf32>
    %c0_4 = arith.constant 0 : index
    %c0_5 = arith.constant 0 : index
    %c0_6 = arith.constant 0 : index
    %10 = vector.load %arg4[%c0_4, %c0_5, %c0_6] : memref<2x8x1xf32, #tpu.memory_space<vmem>>, vector<1x8x1xf32>
    %11 = vector.shape_cast %10 : vector<1x8x1xf32> to vector<8x1xf32>
    %c1 = arith.constant 1 : index
    %c0_7 = arith.constant 0 : index
    %c0_8 = arith.constant 0 : index
    %12 = vector.load %arg4[%c1, %c0_7, %c0_8] : memref<2x8x1xf32, #tpu.memory_space<vmem>>, vector<1x8x1xf32>
    %13 = vector.shape_cast %12 : vector<1x8x1xf32> to vector<8x1xf32>
    %14 = arith.mulf %4, %4 : vector<8x1024xf32>
    %15 = arith.mulf %5, %5 : vector<8x1024xf32>
    %16 = arith.addf %14, %15 : vector<8x1024xf32>
    %17 = arith.mulf %6, %6 : vector<8x1024xf32>
    %18 = arith.addf %16, %17 : vector<8x1024xf32>
    %19 = math.sqrt %18 : vector<8x1024xf32>
    %cst_9 = arith.constant 9.99999996E-13 : f32
    %20 = vector.broadcast %cst_9 : f32 to vector<8x1024xf32>
    %21 = arith.addf %19, %20 : vector<8x1024xf32>
    %22 = vector.broadcast %13 : vector<8x1xf32> to vector<8x1024xf32>
    %23 = arith.divf %22, %21 : vector<8x1024xf32>
    %24 = vector.broadcast %11 : vector<8x1xf32> to vector<8x1024xf32>
    %25 = arith.subf %24, %23 : vector<8x1024xf32>
    %26 = arith.mulf %4, %25 : vector<8x1024xf32>
    %27 = arith.mulf %5, %25 : vector<8x1024xf32>
    %28 = arith.mulf %6, %25 : vector<8x1024xf32>
    %29 = arith.mulf %26, %7 : vector<8x1024xf32>
    %30 = arith.mulf %27, %8 : vector<8x1024xf32>
    %31 = arith.addf %29, %30 : vector<8x1024xf32>
    %32 = arith.mulf %28, %9 : vector<8x1024xf32>
    %33 = arith.addf %31, %32 : vector<8x1024xf32>
    %34 = arith.mulf %7, %7 : vector<8x1024xf32>
    %35 = arith.mulf %8, %8 : vector<8x1024xf32>
    %36 = arith.addf %34, %35 : vector<8x1024xf32>
    %37 = arith.mulf %9, %9 : vector<8x1024xf32>
    %38 = arith.addf %36, %37 : vector<8x1024xf32>
    %cst_10 = arith.constant 9.99999996E-13 : f32
    %39 = vector.broadcast %cst_10 : f32 to vector<8x1024xf32>
    %40 = arith.addf %38, %39 : vector<8x1024xf32>
    %41 = arith.divf %33, %40 : vector<8x1024xf32>
    %cst_11 = arith.constant 0.000000e+00 : f32
    %42 = vector.broadcast %cst_11 : f32 to vector<8x1024xf32>
    %43 = arith.minimumf %41, %42 : vector<8x1024xf32>
    %cst_12 = arith.constant 8.000000e-01 : f32
    %44 = vector.broadcast %cst_12 : f32 to vector<8x1024xf32>
    %45 = arith.mulf %44, %43 : vector<8x1024xf32>
    %46 = arith.mulf %45, %7 : vector<8x1024xf32>
    %47 = arith.subf %26, %46 : vector<8x1024xf32>
    %c0_13 = arith.constant 0 : index
    %c0_14 = arith.constant 0 : index
    %c0_15 = arith.constant 0 : index
    %c0_16 = arith.constant 0 : index
    %48 = vector.load %arg5[%c0_13, %c0_14, %c0_15, %c0_16] : memref<1x8x3x1024xf32, #tpu.memory_space<vmem>>, vector<1x8x1x1024xf32>
    %49 = vector.shape_cast %48 : vector<1x8x1x1024xf32> to vector<8x1024xf32>
    %50 = vector.shape_cast %47 : vector<8x1024xf32> to vector<1x8x1x1024xf32>
    tpu.vector_store %arg5[%c0_13, %c0_14, %c0_15, %c0_16], %50 {strides = array<i32>} : memref<1x8x3x1024xf32, #tpu.memory_space<vmem>>, vector<1x8x1x1024xf32>,
    %51 = arith.mulf %45, %8 : vector<8x1024xf32>
    %52 = arith.subf %27, %51 : vector<8x1024xf32>
    %c0_17 = arith.constant 0 : index
    %c0_18 = arith.constant 0 : index
    %c1_19 = arith.constant 1 : index
    %c0_20 = arith.constant 0 : index
    %53 = vector.load %arg5[%c0_17, %c0_18, %c1_19, %c0_20] : memref<1x8x3x1024xf32, #tpu.memory_space<vmem>>, vector<1x8x1x1024xf32>
    %54 = vector.shape_cast %53 : vector<1x8x1x1024xf32> to vector<8x1024xf32>
    %55 = vector.shape_cast %52 : vector<8x1024xf32> to vector<1x8x1x1024xf32>
    tpu.vector_store %arg5[%c0_17, %c0_18, %c1_19, %c0_20], %55 {strides = array<i32>} : memref<1x8x3x1024xf32, #tpu.memory_space<vmem>>, vector<1x8x1x1024xf32>,
    %56 = arith.mulf %45, %9 : vector<8x1024xf32>
    %57 = arith.subf %28, %56 : vector<8x1024xf32>
    %c0_21 = arith.constant 0 : index
    %c0_22 = arith.constant 0 : index
    %c2 = arith.constant 2 : index
    %c0_23 = arith.constant 0 : index
    %58 = vector.load %arg5[%c0_21, %c0_22, %c2, %c0_23] : memref<1x8x3x1024xf32, #tpu.memory_space<vmem>>, vector<1x8x1x1024xf32>
    %59 = vector.shape_cast %58 : vector<1x8x1x1024xf32> to vector<8x1024xf32>
    %60 = vector.shape_cast %57 : vector<8x1024xf32> to vector<1x8x1x1024xf32>
    tpu.vector_store %arg5[%c0_21, %c0_22, %c2, %c0_23], %60 {strides = array<i32>} : memref<1x8x3x1024xf32, #tpu.memory_space<vmem>>, vector<1x8x1x1024xf32>,
    return
  }
  func.func @transform_0(%arg0: i32, %arg1: i32) -> (i32, i32, i32) {
    %c0_i32 = arith.constant 0 : i32
    %c0_i32_0 = arith.constant 0 : i32
    return %arg0, %c0_i32, %arg1 : i32, i32, i32
  }
  func.func @transform_1(%arg0: i32, %arg1: i32) -> (i32, i32) {
    %c0_i32 = arith.constant 0 : i32
    %c0_i32_0 = arith.constant 0 : i32
    %c0_i32_1 = arith.constant 0 : i32
    return %c0_i32, %c0_i32_0 : i32, i32
  }
  func.func @transform_2(%arg0: i32, %arg1: i32) -> (i32, i32, i32) {
    %c0_i32 = arith.constant 0 : i32
    %c0_i32_0 = arith.constant 0 : i32
    %c0_i32_1 = arith.constant 0 : i32
    %c0_i32_2 = arith.constant 0 : i32
    return %c0_i32, %c0_i32_0, %c0_i32_1 : i32, i32, i32
  }
  func.func @transform_3(%arg0: i32, %arg1: i32) -> (i32, i32, i32, i32) {
    %c0_i32 = arith.constant 0 : i32
    %c0_i32_0 = arith.constant 0 : i32
    %c0_i32_1 = arith.constant 0 : i32
    return %arg0, %c0_i32, %c0_i32_0, %arg1 : i32, i32, i32, i32
  }
}

</mosaic_0001>

<llo_original>
// kernel: vn_linear_leakyrelu.2
$region0: #{vn_linear_leakyrelu.2}
  #allocation0 [shape = 'u32[]', space=smem, size = 0x4, offset = 0x4, fixed_abs, tag = 'smem constant byte address 0x4 - core index']
  #allocation1 [shape = 'u32[144,128]{1,0:T(1,128)}', space=vmem, size = 0x12000, scoped, tag = 'internal scratch']
  %s0 = inlined_call_operand.vmem [shape: f32[2,12,1024], index: 0, kind: input, shape index: {}]
  %s1 = inlined_call_operand.vmem [shape: f32[24,12], index: 1, kind: input, shape index: {}]
  %s2 = inlined_call_operand.vmem [shape: f32[8,1], index: 2, kind: output, shape index: {0}]
  %s3 = inlined_call_operand.vmem [shape: f32[8,1], index: 3, kind: output, shape index: {1}]
  %4 = xla_tuple %s2, %s3
  %s5 = sld [smem:[#allocation0]]
  $region53: #{vn_linear_leakyrelu.2} parent=0
    _
  %s7 = ssub.s32 1, %s5
  %s8 = scalar_select 0, %s7, %s5
  loop: start=0, step=1, limit=4
  $region2: #{vn_linear_leakyrelu.2} parent=0 // loop_pre_header
    _
  $region3: #{vn_linear_leakyrelu.2} parent=0 // loop_header
    %s10 = sphi 0, %s14
    %p11 = scmp.ge.s32.totalorder %s10, 4
    %s17 = sphi 0, %s29
    %s18 = sphi 0, %s25
    %s19 = sphi 0, %s17
    %s20 = sphi 0, %s18
    %s21 = sphi 0, %s19
    %s22 = sphi 0, %s20
    %s34 = sphi 0, %s36
    %s37 = sphi 0, %s34
    %s38 = sphi 0, %s37
    %s54 = sphi 0, %s38
    %s58 = sphi 0, %s58
    %s60 = sphi 0, %s58
    %s61 = sphi 0, %s60
    %s75 = sphi 0, %s61
    %s79 = sphi 0, %s79
    %s81 = sphi 0, %s79
    %s82 = sphi 0, %s81
    %s96 = sphi 0, %s82
    %s100 = sphi 0, %s100
    %s102 = sphi 0, %s100
    %s103 = sphi 0, %s102
    %s117 = sphi 0, %s103
  $region4: #{vn_linear_leakyrelu.2} parent=0 // loop_header_branch
    %13 = sbr.rel (%p11) target = $region8
  $region5: #{vn_linear_leakyrelu.2} parent=0 // loop_body
    %s15 = ssub.s32 %s10, 1
    %s16 = ssub.s32 %s10, 2
    %s23 = sadd.s32 1, %s18
    %p24 = scmp.ge.s32.totalorder %s23, 1
    %s25 = scalar_select %p24, 0, %s23
    %s26 = sadd.s32 1, %s17
    %s27 = scalar_select %p24, %s26, %s17
    %p28 = scmp.ge.s32.totalorder %s27, 2
    %s29 = scalar_select %p28, 0, %s27
    %s30 = ssub.s32 %s17, %s29
    %s31 = ssub.s32 %s18, %s25
    %s32 = sor.u32 %s30, %s31
    %p33 = scmp.eq.s32.totalorder %s32, 0
    %s35 = sadd.s32 %s34, 1
    %s36 = scalar_select %p33, %s34, %s35
    %p39 = pneg %p33
    %p40 = scmp.eq.s32.totalorder %s10, 1
    %p41 = por %p39, %p40
    %p42 = scmp.ne.s32.totalorder %s34, %s37
    %p43 = scmp.eq.s32.totalorder %s10, 0
    %p44 = por %p42, %p43
    %p45 = scmp.ne.s32.totalorder %s34, %s37
    %p46 = scmp.eq.s32.totalorder %s15, 1
    %p47 = por %p45, %p46
    %p48 = scmp.ne.s32.totalorder %s37, %s38
    %p49 = scmp.eq.s32.totalorder %s15, 0
    %p50 = por %p48, %p49
    %p51 = scmp.ne.s32.totalorder %s37, %s38
    %p52 = scmp.eq.s32.totalorder %s16, 1
    %p53 = por %p51, %p52
    %p55 = scmp.ne.s32.totalorder %s38, %s54
    %p56 = scmp.eq.s32.totalorder %s16, 0
    %p57 = por %p55, %p56
    %s59 = sadd.s32 %s58, 1
    %p62 = scmp.eq.s32.totalorder %s10, 1
    %p63 = scmp.ne.s32.totalorder %s58, %s60
    %p64 = scmp.eq.s32.totalorder %s10, 0
    %p65 = por %p63, %p64
    %p66 = scmp.ne.s32.totalorder %s58, %s60
    %p67 = scmp.eq.s32.totalorder %s15, 1
    %p68 = por %p66, %p67
    %p69 = scmp.ne.s32.totalorder %s60, %s61
    %p70 = scmp.eq.s32.totalorder %s15, 0
    %p71 = por %p69, %p70
    %p72 = scmp.ne.s32.totalorder %s60, %s61
    %p73 = scmp.eq.s32.totalorder %s16, 1
    %p74 = por %p72, %p73
    %p76 = scmp.ne.s32.totalorder %s61, %s75
    %p77 = scmp.eq.s32.totalorder %s16, 0
    %p78 = por %p76, %p77
    %s80 = sadd.s32 %s79, 1
    %p83 = scmp.eq.s32.totalorder %s10, 1
    %p84 = scmp.ne.s32.totalorder %s79, %s81
    %p85 = scmp.eq.s32.totalorder %s10, 0
    %p86 = por %p84, %p85
    %p87 = scmp.ne.s32.totalorder %s79, %s81
    %p88 = scmp.eq.s32.totalorder %s15, 1
    %p89 = por %p87, %p88
    %p90 = scmp.ne.s32.totalorder %s81, %s82
    %p91 = scmp.eq.s32.totalorder %s15, 0
    %p92 = por %p90, %p91
    %p93 = scmp.ne.s32.totalorder %s81, %s82
    %p94 = scmp.eq.s32.totalorder %s16, 1
    %p95 = por %p93, %p94
    %p97 = scmp.ne.s32.totalorder %s82, %s96
    %p98 = scmp.eq.s32.totalorder %s16, 0
    %p99 = por %p97, %p98
    %s101 = sadd.s32 %s100, 1
    %p104 = scmp.eq.s32.totalorder %s10, 1
    %p105 = scmp.ne.s32.totalorder %s100, %s102
    %p106 = scmp.eq.s32.totalorder %s10, 0
    %p107 = por %p105, %p106
    %p108 = scmp.ne.s32.totalorder %s100, %s102
    %p109 = scmp.eq.s32.totalorder %s15, 1
    %p110 = por %p108, %p109
    %p111 = scmp.ne.s32.totalorder %s102, %s103
    %p112 = scmp.eq.s32.totalorder %s15, 0
    %p113 = por %p111, %p112
    %p114 = scmp.ne.s32.totalorder %s102, %s103
    %p115 = scmp.eq.s32.totalorder %s16, 1
    %p116 = por %p114, %p115
    %p118 = scmp.ne.s32.totalorder %s103, %s117
    %p119 = scmp.eq.s32.totalorder %s16, 0
    %p120 = por %p118, %p119
    %p121 = scmp.le.s32.totalorder 1, %s10
    %p122 = scmp.lt.s32.totalorder %s10, 3
    %p123 = pnand %p121, %p122
    %p124 = pneg %p123
    // Predicated region
    $region9: #{vn_linear_leakyrelu.2} parent=5 // pred_check
      _
    $region10: #{vn_linear_leakyrelu.2} parent=5 // pred_check_branch
      %126 = sbr.rel (%p123) target = $region12
    $region11: #{vn_linear_leakyrelu.2} parent=5 // pred_region
      %s127 = ssub.s32 %s10, 1
      // Predicated region
      $region13: #{vn_linear_leakyrelu.2} parent=11 // pred_check
        %p128 = pneg %p71
      $region14: #{vn_linear_leakyrelu.2} parent=11 // pred_check_branch
        %130 = sbr.rel (%p128) target = $region16
      $region15: #{vn_linear_leakyrelu.2} parent=11 // pred_region
        _
      $region16: #{vn_linear_leakyrelu.2} parent=11 // pred_fallthru
        _
    $region12: #{vn_linear_leakyrelu.2} parent=5 // pred_fallthru
      _
    %p131 = scmp.lt.s32.totalorder %s10, 2
    // Predicated region
    $region17: #{vn_linear_leakyrelu.2} parent=5 // pred_check
      %p132 = pneg %p131
    $region18: #{vn_linear_leakyrelu.2} parent=5 // pred_check_branch
      %134 = sbr.rel (%p132) target = $region20
    $region19: #{vn_linear_leakyrelu.2} parent=5 // pred_region
      // Predicated region
      $region21: #{vn_linear_leakyrelu.2} parent=19 // pred_check
        %p135 = pneg %p44
      $region22: #{vn_linear_leakyrelu.2} parent=19 // pred_check_branch
        %137 = sbr.rel (%p135) target = $region24
      $region23: #{vn_linear_leakyrelu.2} parent=19 // pred_region
        %s138 = smul.u32 8, %s18
        %p139 = scmp.lt.s32.totalorder %s17, 1
        %s140 = scalar_select %p139, %s17, 1
        %p141 = scmp.lt.s32.totalorder %s138, 7
        %s142 = scalar_select %p141, %s138, 7
        %s143 = smul.addr %s140, 16
        %s144 = sadd.s32 %s142, %s143
        %s145 = smul.addr %s144, 8
        %s146 = scalar_lea.vmem %s0, %s145
        %s147 = smul.u32 8, %s18
      $region24: #{vn_linear_leakyrelu.2} parent=19 // pred_fallthru
        _
    $region20: #{vn_linear_leakyrelu.2} parent=5 // pred_fallthru
      _
    %p148 = scmp.le.s32.totalorder 1, %s10
    %p149 = scmp.lt.s32.totalorder %s10, 3
    %p150 = pnand %p148, %p149
    %p151 = pneg %p150
    // Predicated region
    $region25: #{vn_linear_leakyrelu.2} parent=5 // pred_check
      _
    $region26: #{vn_linear_leakyrelu.2} parent=5 // pred_check_branch
      %153 = sbr.rel (%p150) target = $region28
    $region27: #{vn_linear_leakyrelu.2} parent=5 // pred_region
      %s154 = ssub.s32 %s10, 1
      %s155 = smul.u32 8, %s20
      %p156 = scmp.lt.s32.totalorder %s19, 1
      %s157 = scalar_select %p156, %s19, 1
      %p158 = scmp.lt.s32.totalorder %s155, 7
      %s159 = scalar_select %p158, %s155, 7
      %s160 = smul.addr %s157, 16
      %s161 = sadd.s32 %s159, %s160
      %s162 = smul.addr %s161, 8
      %s163 = scalar_lea.vmem %s0, %s162
      %p164 = pneg %p50
      %p165 = pneg %p47
      %p166 = pneg %p71
      %p167 = pneg %p68
      %p168 = pneg %p92
      %p169 = pneg %p89
      %p170 = pneg %p113
      %p171 = pneg %p110
      %s172 = smul.u32 8, %s20
      %p173 = scmp.lt.s32.totalorder %s19, 1
      %s174 = scalar_select %p173, %s19, 1
      %p175 = scmp.lt.s32.totalorder %s172, 7
      %s176 = scalar_select %p175, %s172, 7
      %s177 = smul.addr %s174, 16
      %s178 = sadd.s32 %s176, %s177
      %s179 = smul.addr %s178, 8
      %s180 = scalar_lea.vmem %s0, %s179
      %s181 = smul.u32 8, %s20
      %p182 = scmp.eq.s32.totalorder %s19, 0
      %p183 = scmp.eq.s32.totalorder %s20, 0
      %p184 = pnand %p182, %p183
      %p185 = pneg %p184
      // Predicated region
      $region29: #{vn_linear_leakyrelu.2} parent=27 // pred_check
        _
      $region30: #{vn_linear_leakyrelu.2} parent=27 // pred_check_branch
        %187 = sbr.rel (%p184) target = $region32
      $region31: #{vn_linear_leakyrelu.2} parent=27 // pred_region
        %vm188 = vcmask 7168
        %189 = vst.msk [vmem:[%s2] sm:$0xff] %vm188, 0.0
        %190 = vst.msk [vmem:[%s3] sm:$0xff] %vm188, 0.0
      $region32: #{vn_linear_leakyrelu.2} parent=27 // pred_fallthru
        _
      %v191 = vld [vmem:[%s180] sm:$0xff]
      %v192 = vld [vmem:[%s180 + $0x8] sm:$0xff]
      %v193 = vld [vmem:[%s180 + $0x10] sm:$0xff]
      %v194 = vld [vmem:[%s180 + $0x18] sm:$0xff]
      %v195 = vld [vmem:[%s180 + $0x20] sm:$0xff]
      %v196 = vld [vmem:[%s180 + $0x28] sm:$0xff]
      %v197 = vld [vmem:[%s180 + $0x30] sm:$0xff]
      %v198 = vld [vmem:[%s180 + $0x38] sm:$0xff]
      %v199 = vld [vmem:[%s180 + $0x40] sm:$0xf]
      %v200 = vld [vmem:[%s180 + $0x48] sm:$0xf]
      %v201 = vld [vmem:[%s180 + $0x50] sm:$0xf]
      %v202 = vld [vmem:[%s180 + $0x58] sm:$0xf]
      %v203 = vld [vmem:[%s180 + $0x60] sm:$0xf]
      %v204 = vld [vmem:[%s180 + $0x68] sm:$0xf]
      %v205 = vld [vmem:[%s180 + $0x70] sm:$0xf]
      %v206 = vld [vmem:[%s180 + $0x78] sm:$0xf]
      %v207 = vld [vmem:[%s1] sm:$0xff]
      %v208 = vld [vmem:[%s1 + $0x8] sm:$0xff]
      %v209 = vld [vmem:[%s1 + $0x10] sm:$0xff]
      %vm210 = vcmask 97280
      %v212 = vsel %vm210, %v207, 0
      %v215 = vsel %vm210, %v208, 0
      %v218 = vsel %vm210, %v209, 0
      %vm220 = vcmask 1043456
      %v222 = vsel %vm220, %v199, 0
      %v225 = vsel %vm220, %v200, 0
      %v228 = vsel %vm220, %v201, 0
      %v231 = vsel %vm220, %v202, 0
      %v234 = vsel %vm220, %v203, 0
      %v237 = vsel %vm220, %v204, 0
      %v240 = vsel %vm220, %v205, 0
      %v243 = vsel %vm220, %v206, 0
      %245 = vmatprep.subr.mxu0 %v192
      %246 = vmatpush1.msra.mxu0 %v191
      %247 = vmatprep.subr.mxu0 %v225
      %248 = vmatpush1.msra.mxu0 %v222
      %249 = vmatprep.subr.mxu0 0.0
      %250 = vmatpush1.msra.mxu0 0.0
      %251 = vmatprep.subr.mxu0 0.0
      %252 = vmatpush1.msra.mxu0 0.0
      %253 = vmatprep.subr.mxu0 0.0
      %254 = vmatpush1.msra.mxu0 0.0
      %255 = vmatprep.subr.mxu0 0.0
      %256 = vmatpush1.msra.mxu0 0.0
      %257 = vmatprep.subr.mxu0 0.0
      %258 = vmatpush1.msra.mxu0 0.0
      %259 = vmatprep.subr.mxu0 0.0
      %260 = vmatpush1.msra.mxu0 0.0
      %261 = vmatprep.subr.mxu0 0.0
      %262 = vmatpush1.msra.mxu0 0.0
      %263 = vmatprep.subr.mxu0 0.0
      %264 = vmatpush1.msra.mxu0 0.0
      %265 = vmatprep.subr.mxu0 0.0
      %266 = vmatpush1.msra.mxu0 0.0
      %267 = vmatprep.subr.mxu0 0.0
      %268 = vmatpush1.msra.mxu0 0.0
      %269 = vmatprep.subr.mxu0 0.0
      %270 = vmatpush1.msra.mxu0 0.0
      %271 = vmatprep.subr.mxu0 0.0
      %272 = vmatpush1.msra.mxu0 0.0
      %273 = vmatprep.subr.mxu0 0.0
      %274 = vmatpush1.msra.mxu0 0.0
      %275 = vmatprep.subr.mxu0 0.0
      %276 = vmatpush1.msra.mxu0 0.0
      %277 = vmatprep.subr.mxu0 0.0
      %278 = vmatpush1.msra.mxu0 0.0
      %279 = vmatprep.subr.mxu0 0.0
      %280 = vmatpush1.msra.mxu0 0.0
      %281 = vmatprep.subr.mxu0 0.0
      %282 = vmatpush1.msra.mxu0 0.0
      %283 = vmatprep.subr.mxu0 0.0
      %284 = vmatpush1.msra.mxu0 0.0
      %285 = vmatprep.subr.mxu0 0.0
      %286 = vmatpush1.msra.mxu0 0.0
      %287 = vmatprep.subr.mxu0 0.0
      %288 = vmatpush1.msra.mxu0 0.0
      %289 = vmatprep.subr.mxu0 0.0
      %290 = vmatpush1.msra.mxu0 0.0
      %291 = vmatprep.subr.mxu0 0.0
      %292 = vmatpush1.msra.mxu0 0.0
      %293 = vmatprep.subr.mxu0 0.0
      %294 = vmatpush1.msra.mxu0 0.0
      %295 = vmatprep.subr.mxu0 0.0
      %296 = vmatpush1.msra.mxu0 0.0
      %297 = vmatprep.subr.mxu0 0.0
      %298 = vmatpush1.msra.mxu0 0.0
      %299 = vmatprep.subr.mxu0 0.0
      %300 = vmatpush1.msra.mxu0 0.0
      %301 = vmatprep.subr.mxu0 0.0
      %302 = vmatpush1.msra.mxu0 0.0
      %303 = vmatprep.subr.mxu0 0.0
      %304 = vmatpush1.msra.mxu0 0.0
      %305 = vmatprep.subr.mxu0 0.0
      %306 = vmatpush1.msra.mxu0 0.0
      %307 = vmatprep.subr.mxu0 0.0
      %308 = vmatpush1.msra.mxu0 0.0
      %309 = vmatprep.mubr.f32.mxu0 0.0
      %310 = vmatmul.mubr.f32.gmra.mrb[0].mxu0 %v212
      %v311 = vpop.f32.mrb[0].mxu0
      %v312 = vadd.f32 0.0, %v311
      %v313 = vpop.f32.mrb[0].mxu0
      %v314 = vadd.f32 0.0, %v313
      %315 = vmatprep.mubr.f32.mxu0 0.0
      %316 = vmatmul.mubr.f32.gmra.mrb[0].mxu0 %v215
      %v317 = vpop.f32.mrb[0].mxu0
      %v318 = vadd.f32 0.0, %v317
      %v319 = vpop.f32.mrb[0].mxu0
      %v320 = vadd.f32 0.0, %v319
      %321 = vmatprep.mubr.f32.mxu0 0.0
      %322 = vmatmul.mubr.f32.gmra.mrb[0].mxu0 %v218
      %v323 = vpop.f32.mrb[0].mxu0
      %v324 = vadd.f32 0.0, %v323
      %v325 = vpop.f32.mrb[0].mxu0
      %v326 = vadd.f32 0.0, %v325
      %327 = vdwg.mxu0
      %328 = vmatprep.subr.mxu0 %v194
      %329 = vmatpush1.msra.mxu0 %v193
      %330 = vmatprep.subr.mxu0 %v231
      %331 = vmatpush1.msra.mxu0 %v228
      %332 = vmatprep.subr.mxu0 0.0
      %333 = vmatpush1.msra.mxu0 0.0
      %334 = vmatprep.subr.mxu0 0.0
      %335 = vmatpush1.msra.mxu0 0.0
      %336 = vmatprep.subr.mxu0 0.0
      %337 = vmatpush1.msra.mxu0 0.0
      %338 = vmatprep.subr.mxu0 0.0
      %339 = vmatpush1.msra.mxu0 0.0
      %340 = vmatprep.subr.mxu0 0.0
      %341 = vmatpush1.msra.mxu0 0.0
      %342 = vmatprep.subr.mxu0 0.0
      %343 = vmatpush1.msra.mxu0 0.0
      %344 = vmatprep.subr.mxu0 0.0
      %345 = vmatpush1.msra.mxu0 0.0
      %346 = vmatprep.subr.mxu0 0.0
      %347 = vmatpush1.msra.mxu0 0.0
      %348 = vmatprep.subr.mxu0 0.0
      %349 = vmatpush1.msra.mxu0 0.0
      %350 = vmatprep.subr.mxu0 0.0
      %351 = vmatpush1.msra.mxu0 0.0
      %352 = vmatprep.subr.mxu0 0.0
      %353 = vmatpush1.msra.mxu0 0.0
      %354 = vmatprep.subr.mxu0 0.0
      %355 = vmatpush1.msra.mxu0 0.0
      %356 = vmatprep.subr.mxu0 0.0
      %357 = vmatpush1.msra.mxu0 0.0
      %358 = vmatprep.subr.mxu0 0.0
      %359 = vmatpush1.msra.mxu0 0.0
      %360 = vmatprep.subr.mxu0 0.0
      %361 = vmatpush1.msra.mxu0 0.0
      %362 = vmatprep.subr.mxu0 0.0
      %363 = vmatpush1.msra.mxu0 0.0
      %364 = vmatprep.subr.mxu0 0.0
      %365 = vmatpush1.msra.mxu0 0.0
      %366 = vmatprep.subr.mxu0 0.0
      %367 = vmatpush1.msra.mxu0 0.0
      %368 = vmatprep.subr.mxu0 0.0
      %369 = vmatpush1.msra.mxu0 0.0
      %370 = vmatprep.subr.mxu0 0.0
      %371 = vmatpush1.msra.mxu0 0.0
      %372 = vmatprep.subr.mxu0 0.0
      %373 = vmatpush1.msra.mxu0 0.0
      %374 = vmatprep.subr.mxu0 0.0
      %375 = vmatpush1.msra.mxu0 0.0
      %376 = vmatprep.subr.mxu0 0.0
      %377 = vmatpush1.msra.mxu0 0.0
      %378 = vmatprep.subr.mxu0 0.0
      %379 = vmatpush1.msra.mxu0 0.0
      %380 = vmatprep.subr.mxu0 0.0
      %381 = vmatpush1.msra.mxu0 0.0
      %382 = vmatprep.subr.mxu0 0.0
      %383 = vmatpush1.msra.mxu0 0.0
      %384 = vmatprep.subr.mxu0 0.0
      %385 = vmatpush1.msra.mxu0 0.0
      %386 = vmatprep.subr.mxu0 0.0
      %387 = vmatpush1.msra.mxu0 0.0
      %388 = vmatprep.subr.mxu0 0.0
      %389 = vmatpush1.msra.mxu0 0.0
      %390 = vmatprep.subr.mxu0 0.0
      %391 = vmatpush1.msra.mxu0 0.0
      %392 = vmatprep.mubr.f32.mxu0 0.0
      %393 = vmatmul.mubr.f32.gmra.mrb[0].mxu0 %v212
      %v394 = vpop.f32.mrb[0].mxu0
      %v395 = vadd.f32 0.0, %v394
      %v396 = vpop.f32.mrb[0].mxu0
      %v397 = vadd.f32 0.0, %v396
      %398 = vmatprep.mubr.f32.mxu0 0.0
      %399 = vmatmul.mubr.f32.gmra.mrb[0].mxu0 %v215
      %v400 = vpop.f32.mrb[0].mxu0
      %v401 = vadd.f32 0.0, %v400
      %v402 = vpop.f32.mrb[0].mxu0
      %v403 = vadd.f32 0.0, %v402
      %404 = vmatprep.mubr.f32.mxu0 0.0
      %405 = vmatmul.mubr.f32.gmra.mrb[0].mxu0 %v218
      %v406 = vpop.f32.mrb[0].mxu0
      %v407 = vadd.f32 0.0, %v406
      %v408 = vpop.f32.mrb[0].mxu0
      %v409 = vadd.f32 0.0, %v408
      %410 = vdwg.mxu0
      %411 = vmatprep.subr.mxu0 %v196
      %412 = vmatpush1.msra.mxu0 %v195
      %413 = vmatprep.subr.mxu0 %v237
      %414 = vmatpush1.msra.mxu0 %v234
      %415 = vmatprep.subr.mxu0 0.0
      %416 = vmatpush1.msra.mxu0 0.0
      %417 = vmatprep.subr.mxu0 0.0
      %418 = vmatpush1.msra.mxu0 0.0
      %419 = vmatprep.subr.mxu0 0.0
      %420 = vmatpush1.msra.mxu0 0.0
      %421 = vmatprep.subr.mxu0 0.0
      %422 = vmatpush1.msra.mxu0 0.0
      %423 = vmatprep.subr.mxu0 0.0
      %424 = vmatpush1.msra.mxu0 0.0
      %425 = vmatprep.subr.mxu0 0.0
      %426 = vmatpush1.msra.mxu0 0.0
      %427 = vmatprep.subr.mxu0 0.0
      %428 = vmatpush1.msra.mxu0 0.0
      %429 = vmatprep.subr.mxu0 0.0
      %430 = vmatpush1.msra.mxu0 0.0
      %431 = vmatprep.subr.mxu0 0.0
      %432 = vmatpush1.msra.mxu0 0.0
      %433 = vmatprep.subr.mxu0 0.0
      %434 = vmatpush1.msra.mxu0 0.0
      %435 = vmatprep.subr.mxu0 0.0
      %436 = vmatpush1.msra.mxu0 0.0
      %437 = vmatprep.subr.mxu0 0.0
      %438 = vmatpush1.msra.mxu0 0.0
      %439 = vmatprep.subr.mxu0 0.0
      %440 = vmatpush1.msra.mxu0 0.0
      %441 = vmatprep.subr.mxu0 0.0
      %442 = vmatpush1.msra.mxu0 0.0
      %443 = vmatprep.subr.mxu0 0.0
      %444 = vmatpush1.msra.mxu0 0.0
      %445 = vmatprep.subr.mxu0 0.0
      %446 = vmatpush1.msra.mxu0 0.0
      %447 = vmatprep.subr.mxu0 0.0
      %448 = vmatpush1.msra.mxu0 0.0
      %449 = vmatprep.subr.mxu0 0.0
      %450 = vmatpush1.msra.mxu0 0.0
      %451 = vmatprep.subr.mxu0 0.0
      %452 = vmatpush1.msra.mxu0 0.0
      %453 = vmatprep.subr.mxu0 0.0
      %454 = vmatpush1.msra.mxu0 0.0
      %455 = vmatprep.subr.mxu0 0.0
      %456 = vmatpush1.msra.mxu0 0.0
      %457 = vmatprep.subr.mxu0 0.0
      %458 = vmatpush1.msra.mxu0 0.0
      %459 = vmatprep.subr.mxu0 0.0
      %460 = vmatpush1.msra.mxu0 0.0
      %461 = vmatprep.subr.mxu0 0.0
      %462 = vmatpush1.msra.mxu0 0.0
      %463 = vmatprep.subr.mxu0 0.0
      %464 = vmatpush1.msra.mxu0 0.0
      %465 = vmatprep.subr.mxu0 0.0
      %466 = vmatpush1.msra.mxu0 0.0
      %467 = vmatprep.subr.mxu0 0.0
      %468 = vmatpush1.msra.mxu0 0.0
      %469 = vmatprep.subr.mxu0 0.0
      %470 = vmatpush1.msra.mxu0 0.0
      %471 = vmatprep.subr.mxu0 0.0
      %472 = vmatpush1.msra.mxu0 0.0
      %473 = vmatprep.subr.mxu0 0.0
      %474 = vmatpush1.msra.mxu0 0.0
      %475 = vmatprep.mubr.f32.mxu0 0.0
      %476 = vmatmul.mubr.f32.gmra.mrb[0].mxu0 %v212
      %v477 = vpop.f32.mrb[0].mxu0
      %v478 = vadd.f32 0.0, %v477
      %v479 = vpop.f32.mrb[0].mxu0
      %v480 = vadd.f32 0.0, %v479
      %481 = vmatprep.mubr.f32.mxu0 0.0
      %482 = vmatmul.mubr.f32.gmra.mrb[0].mxu0 %v215
      %v483 = vpop.f32.mrb[0].mxu0
      %v484 = vadd.f32 0.0, %v483
      %v485 = vpop.f32.mrb[0].mxu0
      %v486 = vadd.f32 0.0, %v485
      %487 = vmatprep.mubr.f32.mxu0 0.0
      %488 = vmatmul.mubr.f32.gmra.mrb[0].mxu0 %v218
      %v489 = vpop.f32.mrb[0].mxu0
      %v490 = vadd.f32 0.0, %v489
      %v491 = vpop.f32.mrb[0].mxu0
      %v492 = vadd.f32 0.0, %v491
      %493 = vdwg.mxu0
      %494 = vmatprep.subr.mxu0 %v198
      %495 = vmatpush1.msra.mxu0 %v197
      %496 = vmatprep.subr.mxu0 %v243
      %497 = vmatpush1.msra.mxu0 %v240
      %498 = vmatprep.subr.mxu0 0.0
      %499 = vmatpush1.msra.mxu0 0.0
      %500 = vmatprep.subr.mxu0 0.0
      %501 = vmatpush1.msra.mxu0 0.0
      %502 = vmatprep.subr.mxu0 0.0
      %503 = vmatpush1.msra.mxu0 0.0
      %504 = vmatprep.subr.mxu0 0.0
      %505 = vmatpush1.msra.mxu0 0.0
      %506 = vmatprep.subr.mxu0 0.0
      %507 = vmatpush1.msra.mxu0 0.0
      %508 = vmatprep.subr.mxu0 0.0
      %509 = vmatpush1.msra.mxu0 0.0
      %510 = vmatprep.subr.mxu0 0.0
      %511 = vmatpush1.msra.mxu0 0.0
      %512 = vmatprep.subr.mxu0 0.0
      %513 = vmatpush1.msra.mxu0 0.0
      %514 = vmatprep.subr.mxu0 0.0
      %515 = vmatpush1.msra.mxu0 0.0
      %516 = vmatprep.subr.mxu0 0.0
      %517 = vmatpush1.msra.mxu0 0.0
      %518 = vmatprep.subr.mxu0 0.0
      %519 = vmatpush1.msra.mxu0 0.0
      %520 = vmatprep.subr.mxu0 0.0
      %521 = vmatpush1.msra.mxu0 0.0
      %522 = vmatprep.subr.mxu0 0.0
      %523 = vmatpush1.msra.mxu0 0.0
      %524 = vmatprep.subr.mxu0 0.0
      %525 = vmatpush1.msra.mxu0 0.0
      %526 = vmatprep.subr.mxu0 0.0
      %527 = vmatpush1.msra.mxu0 0.0
      %528 = vmatprep.subr.mxu0 0.0
      %529 = vmatpush1.msra.mxu0 0.0
      %530 = vmatprep.subr.mxu0 0.0
      %531 = vmatpush1.msra.mxu0 0.0
      %532 = vmatprep.subr.mxu0 0.0
      %533 = vmatpush1.msra.mxu0 0.0
      %534 = vmatprep.subr.mxu0 0.0
      %535 = vmatpush1.msra.mxu0 0.0
      %536 = vmatprep.subr.mxu0 0.0
      %537 = vmatpush1.msra.mxu0 0.0
      %538 = vmatprep.subr.mxu0 0.0
      %539 = vmatpush1.msra.mxu0 0.0
      %540 = vmatprep.subr.mxu0 0.0
      %541 = vmatpush1.msra.mxu0 0.0
      %542 = vmatprep.subr.mxu0 0.0
      %543 = vmatpush1.msra.mxu0 0.0
      %544 = vmatprep.subr.mxu0 0.0
      %545 = vmatpush1.msra.mxu0 0.0
      %546 = vmatprep.subr.mxu0 0.0
      %547 = vmatpush1.msra.mxu0 0.0
      %548 = vmatprep.subr.mxu0 0.0
      %549 = vmatpush1.msra.mxu0 0.0
      %550 = vmatprep.subr.mxu0 0.0
      %551 = vmatpush1.msra.mxu0 0.0
      %552 = vmatprep.subr.mxu0 0.0
      %553 = vmatpush1.msra.mxu0 0.0
      %554 = vmatprep.subr.mxu0 0.0
      %555 = vmatpush1.msra.mxu0 0.0
      %556 = vmatprep.subr.mxu0 0.0
      %557 = vmatpush1.msra.mxu0 0.0
      %558 = vmatprep.mubr.f32.mxu0 0.0
      %559 = vmatmul.mubr.f32.gmra.mrb[0].mxu0 %v212
      %v560 = vpop.f32.mrb[0].mxu0
      %v561 = vadd.f32 0.0, %v560
      %v562 = vpop.f32.mrb[0].mxu0
      %v563 = vadd.f32 0.0, %v562
      %564 = vmatprep.mubr.f32.mxu0 0.0
      %565 = vmatmul.mubr.f32.gmra.mrb[0].mxu0 %v215
      %v566 = vpop.f32.mrb[0].mxu0
      %v567 = vadd.f32 0.0, %v566
      %v568 = vpop.f32.mrb[0].mxu0
      %v569 = vadd.f32 0.0, %v568
      %570 = vmatprep.mubr.f32.mxu0 0.0
      %571 = vmatmul.mubr.f32.gmra.mrb[0].mxu0 %v218
      %v572 = vpop.f32.mrb[0].mxu0
      %v573 = vadd.f32 0.0, %v572
      %v574 = vpop.f32.mrb[0].mxu0
      %v575 = vadd.f32 0.0, %v574
      %576 = vdwg.mxu0
      %v577 = vmul.f32 %v312, %v312
      %v578 = vmul.f32 %v314, %v314
      %v579 = vmul.f32 %v395, %v395
      %v580 = vmul.f32 %v397, %v397
      %v581 = vmul.f32 %v478, %v478
      %v582 = vmul.f32 %v480, %v480
      %v583 = vmul.f32 %v561, %v561
      %v584 = vmul.f32 %v563, %v563
      %v585 = vmul.f32 %v318, %v318
      %v586 = vmul.f32 %v320, %v320
      %v587 = vmul.f32 %v401, %v401
      %v588 = vmul.f32 %v403, %v403
      %v589 = vmul.f32 %v484, %v484
      %v590 = vmul.f32 %v486, %v486
      %v591 = vmul.f32 %v567, %v567
      %v592 = vmul.f32 %v569, %v569
      %v593 = vadd.f32 %v577, %v585
      %v594 = vadd.f32 %v578, %v586
      %v595 = vadd.f32 %v579, %v587
      %v596 = vadd.f32 %v580, %v588
      %v597 = vadd.f32 %v581, %v589
      %v598 = vadd.f32 %v582, %v590
      %v599 = vadd.f32 %v583, %v591
      %v600 = vadd.f32 %v584, %v592
      %v601 = vmul.f32 %v324, %v324
      %v602 = vmul.f32 %v326, %v326
      %v603 = vmul.f32 %v407, %v407
      %v604 = vmul.f32 %v409, %v409
      %v605 = vmul.f32 %v490, %v490
      %v606 = vmul.f32 %v492, %v492
      %v607 = vmul.f32 %v573, %v573
      %v608 = vmul.f32 %v575, %v575
      %v609 = vadd.f32 %v593, %v601
      %v610 = vadd.f32 %v594, %v602
      %v611 = vadd.f32 %v595, %v603
      %v612 = vadd.f32 %v596, %v604
      %v613 = vadd.f32 %v597, %v605
      %v614 = vadd.f32 %v598, %v606
      %v615 = vadd.f32 %v599, %v607
      %v616 = vadd.f32 %v600, %v608
      %v617 = vrsqrt.pop %v609
      %v618 = vmul.f32 %v609, %v617
      %vm619 = vcmp.eq.f32.partialorder %v609, inf
      %v620 = vsel %vm619, %v609, %v618
      %vm621 = vcmp.eq.f32.partialorder %v609, 0.0
      %v622 = vand.u32 %v609, 2147483648
      %v623 = vsel %vm621, %v622, %v620
      %v624 = vrsqrt.pop %v610
      %v625 = vmul.f32 %v610, %v624
      %vm626 = vcmp.eq.f32.partialorder %v610, inf
      %v627 = vsel %vm626, %v610, %v625
      %vm628 = vcmp.eq.f32.partialorder %v610, 0.0
      %v629 = vand.u32 %v610, 2147483648
      %v630 = vsel %vm628, %v629, %v627
      %v631 = vrsqrt.pop %v611
      %v632 = vmul.f32 %v611, %v631
      %vm633 = vcmp.eq.f32.partialorder %v611, inf
      %v634 = vsel %vm633, %v611, %v632
      %vm635 = vcmp.eq.f32.partialorder %v611, 0.0
      %v636 = vand.u32 %v611, 2147483648
      %v637 = vsel %vm635, %v636, %v634
      %v638 = vrsqrt.pop %v612
      %v639 = vmul.f32 %v612, %v638
      %vm640 = vcmp.eq.f32.partialorder %v612, inf
      %v641 = vsel %vm640, %v612, %v639
      %vm642 = vcmp.eq.f32.partialorder %v612, 0.0
      %v643 = vand.u32 %v612, 2147483648
      %v644 = vsel %vm642, %v643, %v641
      %v645 = vrsqrt.pop %v613
      %v646 = vmul.f32 %v613, %v645
      %vm647 = vcmp.eq.f32.partialorder %v613, inf
      %v648 = vsel %vm647, %v613, %v646
      %vm649 = vcmp.eq.f32.partialorder %v613, 0.0
      %v650 = vand.u32 %v613, 2147483648
      %v651 = vsel %vm649, %v650, %v648
      %v652 = vrsqrt.pop %v614
      %v653 = vmul.f32 %v614, %v652
      %vm654 = vcmp.eq.f32.partialorder %v614, inf
      %v655 = vsel %vm654, %v614, %v653
      %vm656 = vcmp.eq.f32.partialorder %v614, 0.0
      %v657 = vand.u32 %v614, 2147483648
      %v658 = vsel %vm656, %v657, %v655
      %v659 = vrsqrt.pop %v615
      %v660 = vmul.f32 %v615, %v659
      %vm661 = vcmp.eq.f32.partialorder %v615, inf
      %v662 = vsel %vm661, %v615, %v660
      %vm663 = vcmp.eq.f32.partialorder %v615, 0.0
      %v664 = vand.u32 %v615, 2147483648
      %v665 = vsel %vm663, %v664, %v662
      %v666 = vrsqrt.pop %v616
      %v667 = vmul.f32 %v616, %v666
      %vm668 = vcmp.eq.f32.partialorder %v616, inf
      %v669 = vsel %vm668, %v616, %v667
      %vm670 = vcmp.eq.f32.partialorder %v616, 0.0
      %v671 = vand.u32 %v616, 2147483648
      %v672 = vsel %vm670, %v671, %v669
      %v673 = vadd.f32 %v623, 1e-12
      %v674 = vadd.f32 %v630, 1e-12
      %v675 = vadd.f32 %v637, 1e-12
      %v676 = vadd.f32 %v644, 1e-12
      %v677 = vadd.f32 %v651, 1e-12
      %v678 = vadd.f32 %v658, 1e-12
      %v679 = vadd.f32 %v665, 1e-12
      %v680 = vadd.f32 %v672, 1e-12
      %v681 = vld [vmem:[%s2] sm:$0xff]
      %v682 = vadd.f32 %v673, %v674
      %v683 = vadd.f32 %v682, %v675
      %v684 = vadd.f32 %v683, %v676
      %v685 = vadd.f32 %v684, %v677
      %v686 = vadd.f32 %v685, %v678
      %v687 = vadd.f32 %v686, %v679
      %v688 = vadd.f32 %v687, %v680
      %689 = vadd.xlane.f32.xlu0 %v688
      %v690 = vpop.xlane.xlu0 %689
      %v691 = vadd.f32 %v681, %v690
      %vm692 = vcmask 7168
      %693 = vst.msk [vmem:[%s2] sm:$0xff] %vm692, %v691
      %v694 = vld [vmem:[%s3] sm:$0xff]
      %v695 = vmul.f32 %v673, %v673
      %v696 = vmul.f32 %v674, %v674
      %v697 = vmul.f32 %v675, %v675
      %v698 = vmul.f32 %v676, %v676
      %v699 = vmul.f32 %v677, %v677
      %v700 = vmul.f32 %v678, %v678
      %v701 = vmul.f32 %v679, %v679
      %v702 = vmul.f32 %v680, %v680
      %v703 = vadd.f32 %v695, %v696
      %v704 = vadd.f32 %v703, %v697
      %v705 = vadd.f32 %v704, %v698
      %v706 = vadd.f32 %v705, %v699
      %v707 = vadd.f32 %v706, %v700
      %v708 = vadd.f32 %v707, %v701
      %v709 = vadd.f32 %v708, %v702
      %710 = vadd.xlane.f32.xlu0 %v709
      %v711 = vpop.xlane.xlu0 %710
      %v712 = vadd.f32 %v694, %v711
      %713 = vst.msk [vmem:[%s3] sm:$0xff] %vm692, %v712
      // Predicated region
      $region33: #{vn_linear_leakyrelu.2} parent=27 // pred_check
        %p714 = pneg %p89
      $region34: #{vn_linear_leakyrelu.2} parent=27 // pred_check_branch
        %716 = sbr.rel (%p714) target = $region36
      $region35: #{vn_linear_leakyrelu.2} parent=27 // pred_region
        _
      $region36: #{vn_linear_leakyrelu.2} parent=27 // pred_fallthru
        _
      // Predicated region
      $region37: #{vn_linear_leakyrelu.2} parent=27 // pred_check
        %p717 = pneg %p110
      $region38: #{vn_linear_leakyrelu.2} parent=27 // pred_check_branch
        %719 = sbr.rel (%p717) target = $region40
      $region39: #{vn_linear_leakyrelu.2} parent=27 // pred_region
        _
      $region40: #{vn_linear_leakyrelu.2} parent=27 // pred_fallthru
        _
      // Predicated region
      $region41: #{vn_linear_leakyrelu.2} parent=27 // pred_check
        %p720 = pneg %p89
      $region42: #{vn_linear_leakyrelu.2} parent=27 // pred_check_branch
        %722 = sbr.rel (%p720) target = $region44
      $region43: #{vn_linear_leakyrelu.2} parent=27 // pred_region
        _
      $region44: #{vn_linear_leakyrelu.2} parent=27 // pred_fallthru
        _
      // Predicated region
      $region45: #{vn_linear_leakyrelu.2} parent=27 // pred_check
        %p723 = pneg %p110
      $region46: #{vn_linear_leakyrelu.2} parent=27 // pred_check_branch
        %725 = sbr.rel (%p723) target = $region48
      $region47: #{vn_linear_leakyrelu.2} parent=27 // pred_region
        _
      $region48: #{vn_linear_leakyrelu.2} parent=27 // pred_fallthru
        _
    $region28: #{vn_linear_leakyrelu.2} parent=5 // pred_fallthru
      _
    %p726 = scmp.le.s32.totalorder 2, %s10
    // Predicated region
    $region49: #{vn_linear_leakyrelu.2} parent=5 // pred_check
      %p727 = pneg %p726
    $region50: #{vn_linear_leakyrelu.2} parent=5 // pred_check_branch
      %729 = sbr.rel (%p727) target = $region52
    $region51: #{vn_linear_leakyrelu.2} parent=5 // pred_region
      %s730 = ssub.s32 %s10, 2
    $region52: #{vn_linear_leakyrelu.2} parent=5 // pred_fallthru
      _
  $region6: #{vn_linear_leakyrelu.2} parent=0 // loop_footer
    %s14 = sadd.s32 1, %s10
  $region7: #{vn_linear_leakyrelu.2} parent=0 // loop_footer_branch
    %9 = sbr.rel target = $region3
  $region8: #{vn_linear_leakyrelu.2} parent=0 // loop_exit
    _

// kernel: vn_linear_leakyrelu.3
$region0: #{vn_linear_leakyrelu.3}
  #allocation0 [shape = 'u32[]', space=smem, size = 0x4, offset = 0x4, fixed_abs, tag = 'smem constant byte address 0x4 - core index']
  #allocation1 [shape = 'u32[144,128]{1,0:T(1,128)}', space=vmem, size = 0x12000, scoped, tag = 'internal scratch']
  %s0 = inlined_call_operand.vmem [shape: f32[2,12,1024], index: 0, kind: input, shape index: {}]
  %s1 = inlined_call_operand.vmem [shape: f32[48,12], index: 1, kind: input, shape index: {}]
  %s2 = inlined_call_operand.vmem [shape: f32[2,8,1], index: 2, kind: input, shape index: {}]
  %s3 = inlined_call_operand.vmem [shape: f32[2,8,3,1024], index: 3, kind: output, shape index: {}]
  %s4 = sld [smem:[#allocation0]]
  $region45: #{vn_linear_leakyrelu.3} parent=0
    _
  %s6 = ssub.s32 1, %s4
  %s7 = scalar_select 0, %s6, %s4
  loop: start=0, step=1, limit=4
  $region2: #{vn_linear_leakyrelu.3} parent=0 // loop_pre_header
    _
  $region3: #{vn_linear_leakyrelu.3} parent=0 // loop_header
    %s9 = sphi 0, %s13
    %p10 = scmp.ge.s32.totalorder %s9, 4
    %s16 = sphi 0, %s28
    %s17 = sphi 0, %s24
    %s18 = sphi 0, %s16
    %s19 = sphi 0, %s17
    %s20 = sphi 0, %s18
    %s21 = sphi 0, %s19
    %s33 = sphi 0, %s35
    %s36 = sphi 0, %s33
    %s37 = sphi 0, %s36
    %s53 = sphi 0, %s37
    %s57 = sphi 0, %s57
    %s59 = sphi 0, %s57
    %s60 = sphi 0, %s59
    %s74 = sphi 0, %s60
    %s78 = sphi 0, %s78
    %s80 = sphi 0, %s78
    %s81 = sphi 0, %s80
    %s95 = sphi 0, %s81
    %s103 = sphi 0, %s105
    %s106 = sphi 0, %s103
    %s107 = sphi 0, %s106
    %s123 = sphi 0, %s107
  $region4: #{vn_linear_leakyrelu.3} parent=0 // loop_header_branch
    %12 = sbr.rel (%p10) target = $region8
  $region5: #{vn_linear_leakyrelu.3} parent=0 // loop_body
    %s14 = ssub.s32 %s9, 1
    %s15 = ssub.s32 %s9, 2
    %s22 = sadd.s32 1, %s17
    %p23 = scmp.ge.s32.totalorder %s22, 1
    %s24 = scalar_select %p23, 0, %s22
    %s25 = sadd.s32 1, %s16
    %s26 = scalar_select %p23, %s25, %s16
    %p27 = scmp.ge.s32.totalorder %s26, 2
    %s28 = scalar_select %p27, 0, %s26
    %s29 = ssub.s32 %s16, %s28
    %s30 = ssub.s32 %s17, %s24
    %s31 = sor.u32 %s29, %s30
    %p32 = scmp.eq.s32.totalorder %s31, 0
    %s34 = sadd.s32 %s33, 1
    %s35 = scalar_select %p32, %s33, %s34
    %p38 = pneg %p32
    %p39 = scmp.eq.s32.totalorder %s9, 1
    %p40 = por %p38, %p39
    %p41 = scmp.ne.s32.totalorder %s33, %s36
    %p42 = scmp.eq.s32.totalorder %s9, 0
    %p43 = por %p41, %p42
    %p44 = scmp.ne.s32.totalorder %s33, %s36
    %p45 = scmp.eq.s32.totalorder %s14, 1
    %p46 = por %p44, %p45
    %p47 = scmp.ne.s32.totalorder %s36, %s37
    %p48 = scmp.eq.s32.totalorder %s14, 0
    %p49 = por %p47, %p48
    %p50 = scmp.ne.s32.totalorder %s36, %s37
    %p51 = scmp.eq.s32.totalorder %s15, 1
    %p52 = por %p50, %p51
    %p54 = scmp.ne.s32.totalorder %s37, %s53
    %p55 = scmp.eq.s32.totalorder %s15, 0
    %p56 = por %p54, %p55
    %s58 = sadd.s32 %s57, 1
    %p61 = scmp.eq.s32.totalorder %s9, 1
    %p62 = scmp.ne.s32.totalorder %s57, %s59
    %p63 = scmp.eq.s32.totalorder %s9, 0
    %p64 = por %p62, %p63
    %p65 = scmp.ne.s32.totalorder %s57, %s59
    %p66 = scmp.eq.s32.totalorder %s14, 1
    %p67 = por %p65, %p66
    %p68 = scmp.ne.s32.totalorder %s59, %s60
    %p69 = scmp.eq.s32.totalorder %s14, 0
    %p70 = por %p68, %p69
    %p71 = scmp.ne.s32.totalorder %s59, %s60
    %p72 = scmp.eq.s32.totalorder %s15, 1
    %p73 = por %p71, %p72
    %p75 = scmp.ne.s32.totalorder %s60, %s74
    %p76 = scmp.eq.s32.totalorder %s15, 0
    %p77 = por %p75, %p76
    %s79 = sadd.s32 %s78, 1
    %p82 = scmp.eq.s32.totalorder %s9, 1
    %p83 = scmp.ne.s32.totalorder %s78, %s80
    %p84 = scmp.eq.s32.totalorder %s9, 0
    %p85 = por %p83, %p84
    %p86 = scmp.ne.s32.totalorder %s78, %s80
    %p87 = scmp.eq.s32.totalorder %s14, 1
    %p88 = por %p86, %p87
    %p89 = scmp.ne.s32.totalorder %s80, %s81
    %p90 = scmp.eq.s32.totalorder %s14, 0
    %p91 = por %p89, %p90
    %p92 = scmp.ne.s32.totalorder %s80, %s81
    %p93 = scmp.eq.s32.totalorder %s15, 1
    %p94 = por %p92, %p93
    %p96 = scmp.ne.s32.totalorder %s81, %s95
    %p97 = scmp.eq.s32.totalorder %s15, 0
    %p98 = por %p96, %p97
    %s99 = ssub.s32 %s16, %s28
    %s100 = ssub.s32 %s17, %s24
    %s101 = sor.u32 %s99, %s100
    %p102 = scmp.eq.s32.totalorder %s101, 0
    %s104 = sadd.s32 %s103, 1
    %s105 = scalar_select %p102, %s103, %s104
    %p108 = pneg %p102
    %p109 = scmp.eq.s32.totalorder %s9, 1
    %p110 = por %p108, %p109
    %p111 = scmp.ne.s32.totalorder %s103, %s106
    %p112 = scmp.eq.s32.totalorder %s9, 0
    %p113 = por %p111, %p112
    %p114 = scmp.ne.s32.totalorder %s103, %s106
    %p115 = scmp.eq.s32.totalorder %s14, 1
    %p116 = por %p114, %p115
    %p117 = scmp.ne.s32.totalorder %s106, %s107
    %p118 = scmp.eq.s32.totalorder %s14, 0
    %p119 = por %p117, %p118
    %p120 = scmp.ne.s32.totalorder %s106, %s107
    %p121 = scmp.eq.s32.totalorder %s15, 1
    %p122 = por %p120, %p121
    %p124 = scmp.ne.s32.totalorder %s107, %s123
    %p125 = scmp.eq.s32.totalorder %s15, 0
    %p126 = por %p124, %p125
    %p127 = scmp.le.s32.totalorder 1, %s9
    %p128 = scmp.lt.s32.totalorder %s9, 3
    %p129 = pnand %p127, %p128
    %p130 = pneg %p129
    // Predicated region
    $region9: #{vn_linear_leakyrelu.3} parent=5 // pred_check
      _
    $region10: #{vn_linear_leakyrelu.3} parent=5 // pred_check_branch
      %132 = sbr.rel (%p129) target = $region12
    $region11: #{vn_linear_leakyrelu.3} parent=5 // pred_region
      %s133 = ssub.s32 %s9, 1
      // Predicated region
      $region13: #{vn_linear_leakyrelu.3} parent=11 // pred_check
        %p134 = pneg %p70
      $region14: #{vn_linear_leakyrelu.3} parent=11 // pred_check_branch
        %136 = sbr.rel (%p134) target = $region16
      $region15: #{vn_linear_leakyrelu.3} parent=11 // pred_region
        _
      $region16: #{vn_linear_leakyrelu.3} parent=11 // pred_fallthru
        _
      // Predicated region
      $region17: #{vn_linear_leakyrelu.3} parent=11 // pred_check
        %p137 = pneg %p91
      $region18: #{vn_linear_leakyrelu.3} parent=11 // pred_check_branch
        %139 = sbr.rel (%p137) target = $region20
      $region19: #{vn_linear_leakyrelu.3} parent=11 // pred_region
        _
      $region20: #{vn_linear_leakyrelu.3} parent=11 // pred_fallthru
        _
    $region12: #{vn_linear_leakyrelu.3} parent=5 // pred_fallthru
      _
    %p140 = scmp.lt.s32.totalorder %s9, 2
    // Predicated region
    $region21: #{vn_linear_leakyrelu.3} parent=5 // pred_check
      %p141 = pneg %p140
    $region22: #{vn_linear_leakyrelu.3} parent=5 // pred_check_branch
      %143 = sbr.rel (%p141) target = $region24
    $region23: #{vn_linear_leakyrelu.3} parent=5 // pred_region
      // Predicated region
      $region25: #{vn_linear_leakyrelu.3} parent=23 // pred_check
        %p144 = pneg %p43
      $region26: #{vn_linear_leakyrelu.3} parent=23 // pred_check_branch
        %146 = sbr.rel (%p144) target = $region28
      $region27: #{vn_linear_leakyrelu.3} parent=23 // pred_region
        %s147 = smul.u32 8, %s17
        %p148 = scmp.lt.s32.totalorder %s16, 1
        %s149 = scalar_select %p148, %s16, 1
        %p150 = scmp.lt.s32.totalorder %s147, 7
        %s151 = scalar_select %p150, %s147, 7
        %s152 = smul.addr %s149, 16
        %s153 = sadd.s32 %s151, %s152
        %s154 = smul.addr %s153, 8
        %s155 = scalar_lea.vmem %s0, %s154
        %s156 = smul.u32 8, %s17
      $region28: #{vn_linear_leakyrelu.3} parent=23 // pred_fallthru
        _
    $region24: #{vn_linear_leakyrelu.3} parent=5 // pred_fallthru
      _
    %p157 = scmp.le.s32.totalorder 1, %s9
    %p158 = scmp.lt.s32.totalorder %s9, 3
    %p159 = pnand %p157, %p158
    %p160 = pneg %p159
    // Predicated region
    $region29: #{vn_linear_leakyrelu.3} parent=5 // pred_check
      _
    $region30: #{vn_linear_leakyrelu.3} parent=5 // pred_check_branch
      %162 = sbr.rel (%p159) target = $region32
    $region31: #{vn_linear_leakyrelu.3} parent=5 // pred_region
      %s163 = ssub.s32 %s9, 1
      %s164 = smul.u32 8, %s19
      %p165 = scmp.lt.s32.totalorder %s18, 1
      %s166 = scalar_select %p165, %s18, 1
      %p167 = scmp.lt.s32.totalorder %s164, 7
      %s168 = scalar_select %p167, %s164, 7
      %s169 = smul.addr %s166, 16
      %s170 = sadd.s32 %s168, %s169
      %s171 = smul.addr %s170, 8
      %s172 = scalar_lea.vmem %s0, %s171
      %p173 = pneg %p49
      %p174 = pneg %p46
      %p175 = pneg %p70
      %p176 = pneg %p67
      %p177 = pneg %p91
      %p178 = pneg %p88
      %p179 = pneg %p119
      %p180 = pneg %p116
      %s181 = smul.u32 8, %s19
      %p182 = scmp.lt.s32.totalorder %s18, 1
      %s183 = scalar_select %p182, %s18, 1
      %p184 = scmp.lt.s32.totalorder %s181, 7
      %s185 = scalar_select %p184, %s181, 7
      %s186 = smul.addr %s183, 64
      %s187 = sadd.s32 %s185, %s186
      %s188 = smul.addr %s187, 4
      %s189 = scalar_lea.vmem %s3, %s188
      %s190 = smul.u32 8, %s19
      %p191 = scmp.lt.s32.totalorder %s18, 1
      %s192 = scalar_select %p191, %s18, 1
      %p193 = scmp.lt.s32.totalorder %s190, 7
      %s194 = scalar_select %p193, %s190, 7
      %s195 = smul.addr %s192, 16
      %s196 = sadd.s32 %s194, %s195
      %s197 = smul.addr %s196, 8
      %s198 = scalar_lea.vmem %s0, %s197
      %s199 = smul.u32 8, %s19
      %s200 = smul.u32 8, %s19
      %p201 = scmp.lt.s32.totalorder %s18, 1
      %s202 = scalar_select %p201, %s18, 1
      %p203 = scmp.lt.s32.totalorder %s200, 7
      %s204 = scalar_select %p203, %s200, 7
      %s205 = smul.addr %s202, 64
      %s206 = sadd.s32 %s204, %s205
      %s207 = smul.addr %s206, 4
      %s208 = scalar_lea.vmem %s3, %s207
      %s209 = smul.u32 8, %s19
      %v210 = vld [vmem:[%s198] sm:$0xff]
      %v211 = vld [vmem:[%s198 + $0x8] sm:$0xff]
      %v212 = vld [vmem:[%s198 + $0x10] sm:$0xff]
      %v213 = vld [vmem:[%s198 + $0x18] sm:$0xff]
      %v214 = vld [vmem:[%s198 + $0x20] sm:$0xff]
      %v215 = vld [vmem:[%s198 + $0x28] sm:$0xff]
      %v216 = vld [vmem:[%s198 + $0x30] sm:$0xff]
      %v217 = vld [vmem:[%s198 + $0x38] sm:$0xff]
      %v218 = vld [vmem:[%s198 + $0x40] sm:$0xf]
      %v219 = vld [vmem:[%s198 + $0x48] sm:$0xf]
      %v220 = vld [vmem:[%s198 + $0x50] sm:$0xf]
      %v221 = vld [vmem:[%s198 + $0x58] sm:$0xf]
      %v222 = vld [vmem:[%s198 + $0x60] sm:$0xf]
      %v223 = vld [vmem:[%s198 + $0x68] sm:$0xf]
      %v224 = vld [vmem:[%s198 + $0x70] sm:$0xf]
      %v225 = vld [vmem:[%s198 + $0x78] sm:$0xf]
      %v226 = vld [vmem:[%s1] sm:$0xff]
      %v227 = vld [vmem:[%s1 + $0x8] sm:$0xff]
      %v228 = vld [vmem:[%s1 + $0x10] sm:$0xff]
      %v229 = vld [vmem:[%s1 + $0x18] sm:$0xff]
      %v230 = vld [vmem:[%s1 + $0x20] sm:$0xff]
      %v231 = vld [vmem:[%s1 + $0x28] sm:$0xff]
      %vm232 = vcmask 97280
      %v234 = vsel %vm232, %v226, 0
      %v237 = vsel %vm232, %v227, 0
      %v240 = vsel %vm232, %v228, 0
      %v243 = vsel %vm232, %v229, 0
      %v246 = vsel %vm232, %v230, 0
      %v249 = vsel %vm232, %v231, 0
      %vm251 = vcmask 1043456
      %v253 = vsel %vm251, %v218, 0
      %v256 = vsel %vm251, %v219, 0
      %v259 = vsel %vm251, %v220, 0
      %v262 = vsel %vm251, %v221, 0
      %v265 = vsel %vm251, %v222, 0
      %v268 = vsel %vm251, %v223, 0
      %v271 = vsel %vm251, %v224, 0
      %v274 = vsel %vm251, %v225, 0
      %276 = vmatprep.subr.mxu0 %v211
      %277 = vmatpush1.msra.mxu0 %v210
      %278 = vmatprep.subr.mxu0 %v256
      %279 = vmatpush1.msra.mxu0 %v253
      %280 = vmatprep.subr.mxu0 0.0
      %281 = vmatpush1.msra.mxu0 0.0
      %282 = vmatprep.subr.mxu0 0.0
      %283 = vmatpush1.msra.mxu0 0.0
      %284 = vmatprep.subr.mxu0 0.0
      %285 = vmatpush1.msra.mxu0 0.0
      %286 = vmatprep.subr.mxu0 0.0
      %287 = vmatpush1.msra.mxu0 0.0
      %288 = vmatprep.subr.mxu0 0.0
      %289 = vmatpush1.msra.mxu0 0.0
      %290 = vmatprep.subr.mxu0 0.0
      %291 = vmatpush1.msra.mxu0 0.0
      %292 = vmatprep.subr.mxu0 0.0
      %293 = vmatpush1.msra.mxu0 0.0
      %294 = vmatprep.subr.mxu0 0.0
      %295 = vmatpush1.msra.mxu0 0.0
      %296 = vmatprep.subr.mxu0 0.0
      %297 = vmatpush1.msra.mxu0 0.0
      %298 = vmatprep.subr.mxu0 0.0
      %299 = vmatpush1.msra.mxu0 0.0
      %300 = vmatprep.subr.mxu0 0.0
      %301 = vmatpush1.msra.mxu0 0.0
      %302 = vmatprep.subr.mxu0 0.0
      %303 = vmatpush1.msra.mxu0 0.0
      %304 = vmatprep.subr.mxu0 0.0
      %305 = vmatpush1.msra.mxu0 0.0
      %306 = vmatprep.subr.mxu0 0.0
      %307 = vmatpush1.msra.mxu0 0.0
      %308 = vmatprep.subr.mxu0 0.0
      %309 = vmatpush1.msra.mxu0 0.0
      %310 = vmatprep.subr.mxu0 0.0
      %311 = vmatpush1.msra.mxu0 0.0
      %312 = vmatprep.subr.mxu0 0.0
      %313 = vmatpush1.msra.mxu0 0.0
      %314 = vmatprep.subr.mxu0 0.0
      %315 = vmatpush1.msra.mxu0 0.0
      %316 = vmatprep.subr.mxu0 0.0
      %317 = vmatpush1.msra.mxu0 0.0
      %318 = vmatprep.subr.mxu0 0.0
      %319 = vmatpush1.msra.mxu0 0.0
      %320 = vmatprep.subr.mxu0 0.0
      %321 = vmatpush1.msra.mxu0 0.0
      %322 = vmatprep.subr.mxu0 0.0
      %323 = vmatpush1.msra.mxu0 0.0
      %324 = vmatprep.subr.mxu0 0.0
      %325 = vmatpush1.msra.mxu0 0.0
      %326 = vmatprep.subr.mxu0 0.0
      %327 = vmatpush1.msra.mxu0 0.0
      %328 = vmatprep.subr.mxu0 0.0
      %329 = vmatpush1.msra.mxu0 0.0
      %330 = vmatprep.subr.mxu0 0.0
      %331 = vmatpush1.msra.mxu0 0.0
      %332 = vmatprep.subr.mxu0 0.0
      %333 = vmatpush1.msra.mxu0 0.0
      %334 = vmatprep.subr.mxu0 0.0
      %335 = vmatpush1.msra.mxu0 0.0
      %336 = vmatprep.subr.mxu0 0.0
      %337 = vmatpush1.msra.mxu0 0.0
      %338 = vmatprep.subr.mxu0 0.0
      %339 = vmatpush1.msra.mxu0 0.0
      %340 = vmatprep.mubr.f32.mxu0 0.0
      %341 = vmatmul.mubr.f32.gmra.mrb[0].mxu0 %v234
      %v342 = vpop.f32.mrb[0].mxu0
      %v343 = vadd.f32 0.0, %v342
      %v344 = vpop.f32.mrb[0].mxu0
      %v345 = vadd.f32 0.0, %v344
      %346 = vmatprep.mubr.f32.mxu0 0.0
      %347 = vmatmul.mubr.f32.gmra.mrb[0].mxu0 %v237
      %v348 = vpop.f32.mrb[0].mxu0
      %v349 = vadd.f32 0.0, %v348
      %v350 = vpop.f32.mrb[0].mxu0
      %v351 = vadd.f32 0.0, %v350
      %352 = vmatprep.mubr.f32.mxu0 0.0
      %353 = vmatmul.mubr.f32.gmra.mrb[0].mxu0 %v240
      %v354 = vpop.f32.mrb[0].mxu0
      %v355 = vadd.f32 0.0, %v354
      %v356 = vpop.f32.mrb[0].mxu0
      %v357 = vadd.f32 0.0, %v356
      %358 = vmatprep.mubr.f32.mxu0 0.0
      %359 = vmatmul.mubr.f32.gmra.mrb[0].mxu0 %v243
      %v360 = vpop.f32.mrb[0].mxu0
      %v361 = vadd.f32 0.0, %v360
      %v362 = vpop.f32.mrb[0].mxu0
      %v363 = vadd.f32 0.0, %v362
      %364 = vmatprep.mubr.f32.mxu0 0.0
      %365 = vmatmul.mubr.f32.gmra.mrb[0].mxu0 %v246
      %v366 = vpop.f32.mrb[0].mxu0
      %v367 = vadd.f32 0.0, %v366
      %v368 = vpop.f32.mrb[0].mxu0
      %v369 = vadd.f32 0.0, %v368
      %370 = vmatprep.mubr.f32.mxu0 0.0
      %371 = vmatmul.mubr.f32.gmra.mrb[0].mxu0 %v249
      %v372 = vpop.f32.mrb[0].mxu0
      %v373 = vadd.f32 0.0, %v372
      %v374 = vpop.f32.mrb[0].mxu0
      %v375 = vadd.f32 0.0, %v374
      %376 = vdwg.mxu0
      %377 = vmatprep.subr.mxu0 %v213
      %378 = vmatpush1.msra.mxu0 %v212
      %379 = vmatprep.subr.mxu0 %v262
      %380 = vmatpush1.msra.mxu0 %v259
      %381 = vmatprep.subr.mxu0 0.0
      %382 = vmatpush1.msra.mxu0 0.0
      %383 = vmatprep.subr.mxu0 0.0
      %384 = vmatpush1.msra.mxu0 0.0
      %385 = vmatprep.subr.mxu0 0.0
      %386 = vmatpush1.msra.mxu0 0.0
      %387 = vmatprep.subr.mxu0 0.0
      %388 = vmatpush1.msra.mxu0 0.0
      %389 = vmatprep.subr.mxu0 0.0
      %390 = vmatpush1.msra.mxu0 0.0
      %391 = vmatprep.subr.mxu0 0.0
      %392 = vmatpush1.msra.mxu0 0.0
      %393 = vmatprep.subr.mxu0 0.0
      %394 = vmatpush1.msra.mxu0 0.0
      %395 = vmatprep.subr.mxu0 0.0
      %396 = vmatpush1.msra.mxu0 0.0
      %397 = vmatprep.subr.mxu0 0.0
      %398 = vmatpush1.msra.mxu0 0.0
      %399 = vmatprep.subr.mxu0 0.0
      %400 = vmatpush1.msra.mxu0 0.0
      %401 = vmatprep.subr.mxu0 0.0
      %402 = vmatpush1.msra.mxu0 0.0
      %403 = vmatprep.subr.mxu0 0.0
      %404 = vmatpush1.msra.mxu0 0.0
      %405 = vmatprep.subr.mxu0 0.0
      %406 = vmatpush1.msra.mxu0 0.0
      %407 = vmatprep.subr.mxu0 0.0
      %408 = vmatpush1.msra.mxu0 0.0
      %409 = vmatprep.subr.mxu0 0.0
      %410 = vmatpush1.msra.mxu0 0.0
      %411 = vmatprep.subr.mxu0 0.0
      %412 = vmatpush1.msra.mxu0 0.0
      %413 = vmatprep.subr.mxu0 0.0
      %414 = vmatpush1.msra.mxu0 0.0
      %415 = vmatprep.subr.mxu0 0.0
      %416 = vmatpush1.msra.mxu0 0.0
      %417 = vmatprep.subr.mxu0 0.0
      %418 = vmatpush1.msra.mxu0 0.0
      %419 = vmatprep.subr.mxu0 0.0
      %420 = vmatpush1.msra.mxu0 0.0
      %421 = vmatprep.subr.mxu0 0.0
      %422 = vmatpush1.msra.mxu0 0.0
      %423 = vmatprep.subr.mxu0 0.0
      %424 = vmatpush1.msra.mxu0 0.0
      %425 = vmatprep.subr.mxu0 0.0
      %426 = vmatpush1.msra.mxu0 0.0
      %427 = vmatprep.subr.mxu0 0.0
      %428 = vmatpush1.msra.mxu0 0.0
      %429 = vmatprep.subr.mxu0 0.0
      %430 = vmatpush1.msra.mxu0 0.0
      %431 = vmatprep.subr.mxu0 0.0
      %432 = vmatpush1.msra.mxu0 0.0
      %433 = vmatprep.subr.mxu0 0.0
      %434 = vmatpush1.msra.mxu0 0.0
      %435 = vmatprep.subr.mxu0 0.0
      %436 = vmatpush1.msra.mxu0 0.0
      %437 = vmatprep.subr.mxu0 0.0
      %438 = vmatpush1.msra.mxu0 0.0
      %439 = vmatprep.subr.mxu0 0.0
      %440 = vmatpush1.msra.mxu0 0.0
      %441 = vmatprep.mubr.f32.mxu0 0.0
      %442 = vmatmul.mubr.f32.gmra.mrb[0].mxu0 %v234
      %v443 = vpop.f32.mrb[0].mxu0
      %v444 = vadd.f32 0.0, %v443
      %v445 = vpop.f32.mrb[0].mxu0
      %v446 = vadd.f32 0.0, %v445
      %447 = vmatprep.mubr.f32.mxu0 0.0
      %448 = vmatmul.mubr.f32.gmra.mrb[0].mxu0 %v237
      %v449 = vpop.f32.mrb[0].mxu0
      %v450 = vadd.f32 0.0, %v449
      %v451 = vpop.f32.mrb[0].mxu0
      %v452 = vadd.f32 0.0, %v451
      %453 = vmatprep.mubr.f32.mxu0 0.0
      %454 = vmatmul.mubr.f32.gmra.mrb[0].mxu0 %v240
      %v455 = vpop.f32.mrb[0].mxu0
      %v456 = vadd.f32 0.0, %v455
      %v457 = vpop.f32.mrb[0].mxu0
      %v458 = vadd.f32 0.0, %v457
      %459 = vmatprep.mubr.f32.mxu0 0.0
      %460 = vmatmul.mubr.f32.gmra.mrb[0].mxu0 %v243
      %v461 = vpop.f32.mrb[0].mxu0
      %v462 = vadd.f32 0.0, %v461
      %v463 = vpop.f32.mrb[0].mxu0
      %v464 = vadd.f32 0.0, %v463
      %465 = vmatprep.mubr.f32.mxu0 0.0
      %466 = vmatmul.mubr.f32.gmra.mrb[0].mxu0 %v246
      %v467 = vpop.f32.mrb[0].mxu0
      %v468 = vadd.f32 0.0, %v467
      %v469 = vpop.f32.mrb[0].mxu0
      %v470 = vadd.f32 0.0, %v469
      %471 = vmatprep.mubr.f32.mxu0 0.0
      %472 = vmatmul.mubr.f32.gmra.mrb[0].mxu0 %v249
      %v473 = vpop.f32.mrb[0].mxu0
      %v474 = vadd.f32 0.0, %v473
      %v475 = vpop.f32.mrb[0].mxu0
      %v476 = vadd.f32 0.0, %v475
      %477 = vdwg.mxu0
      %478 = vmatprep.subr.mxu0 %v215
      %479 = vmatpush1.msra.mxu0 %v214
      %480 = vmatprep.subr.mxu0 %v268
      %481 = vmatpush1.msra.mxu0 %v265
      %482 = vmatprep.subr.mxu0 0.0
      %483 = vmatpush1.msra.mxu0 0.0
      %484 = vmatprep.subr.mxu0 0.0
      %485 = vmatpush1.msra.mxu0 0.0
      %486 = vmatprep.subr.mxu0 0.0
      %487 = vmatpush1.msra.mxu0 0.0
      %488 = vmatprep.subr.mxu0 0.0
      %489 = vmatpush1.msra.mxu0 0.0
      %490 = vmatprep.subr.mxu0 0.0
      %491 = vmatpush1.msra.mxu0 0.0
      %492 = vmatprep.subr.mxu0 0.0
      %493 = vmatpush1.msra.mxu0 0.0
      %494 = vmatprep.subr.mxu0 0.0
      %495 = vmatpush1.msra.mxu0 0.0
      %496 = vmatprep.subr.mxu0 0.0
      %497 = vmatpush1.msra.mxu0 0.0
      %498 = vmatprep.subr.mxu0 0.0
      %499 = vmatpush1.msra.mxu0 0.0
      %500 = vmatprep.subr.mxu0 0.0
      %501 = vmatpush1.msra.mxu0 0.0
      %502 = vmatprep.subr.mxu0 0.0
      %503 = vmatpush1.msra.mxu0 0.0
      %504 = vmatprep.subr.mxu0 0.0
      %505 = vmatpush1.msra.mxu0 0.0
      %506 = vmatprep.subr.mxu0 0.0
      %507 = vmatpush1.msra.mxu0 0.0
      %508 = vmatprep.subr.mxu0 0.0
      %509 = vmatpush1.msra.mxu0 0.0
      %510 = vmatprep.subr.mxu0 0.0
      %511 = vmatpush1.msra.mxu0 0.0
      %512 = vmatprep.subr.mxu0 0.0
      %513 = vmatpush1.msra.mxu0 0.0
      %514 = vmatprep.subr.mxu0 0.0
      %515 = vmatpush1.msra.mxu0 0.0
      %516 = vmatprep.subr.mxu0 0.0
      %517 = vmatpush1.msra.mxu0 0.0
      %518 = vmatprep.subr.mxu0 0.0
      %519 = vmatpush1.msra.mxu0 0.0
      %520 = vmatprep.subr.mxu0 0.0
      %521 = vmatpush1.msra.mxu0 0.0
      %522 = vmatprep.subr.mxu0 0.0
      %523 = vmatpush1.msra.mxu0 0.0
      %524 = vmatprep.subr.mxu0 0.0
      %525 = vmatpush1.msra.mxu0 0.0
      %526 = vmatprep.subr.mxu0 0.0
      %527 = vmatpush1.msra.mxu0 0.0
      %528 = vmatprep.subr.mxu0 0.0
      %529 = vmatpush1.msra.mxu0 0.0
      %530 = vmatprep.subr.mxu0 0.0
      %531 = vmatpush1.msra.mxu0 0.0
      %532 = vmatprep.subr.mxu0 0.0
      %533 = vmatpush1.msra.mxu0 0.0
      %534 = vmatprep.subr.mxu0 0.0
      %535 = vmatpush1.msra.mxu0 0.0
      %536 = vmatprep.subr.mxu0 0.0
      %537 = vmatpush1.msra.mxu0 0.0
      %538 = vmatprep.subr.mxu0 0.0
      %539 = vmatpush1.msra.mxu0 0.0
      %540 = vmatprep.subr.mxu0 0.0
      %541 = vmatpush1.msra.mxu0 0.0
      %542 = vmatprep.mubr.f32.mxu0 0.0
      %543 = vmatmul.mubr.f32.gmra.mrb[0].mxu0 %v234
      %v544 = vpop.f32.mrb[0].mxu0
      %v545 = vadd.f32 0.0, %v544
      %v546 = vpop.f32.mrb[0].mxu0
      %v547 = vadd.f32 0.0, %v546
      %548 = vmatprep.mubr.f32.mxu0 0.0
      %549 = vmatmul.mubr.f32.gmra.mrb[0].mxu0 %v237
      %v550 = vpop.f32.mrb[0].mxu0
      %v551 = vadd.f32 0.0, %v550
      %v552 = vpop.f32.mrb[0].mxu0
      %v553 = vadd.f32 0.0, %v552
      %554 = vmatprep.mubr.f32.mxu0 0.0
      %555 = vmatmul.mubr.f32.gmra.mrb[0].mxu0 %v240
      %v556 = vpop.f32.mrb[0].mxu0
      %v557 = vadd.f32 0.0, %v556
      %v558 = vpop.f32.mrb[0].mxu0
      %v559 = vadd.f32 0.0, %v558
      %560 = vmatprep.mubr.f32.mxu0 0.0
      %561 = vmatmul.mubr.f32.gmra.mrb[0].mxu0 %v243
      %v562 = vpop.f32.mrb[0].mxu0
      %v563 = vadd.f32 0.0, %v562
      %v564 = vpop.f32.mrb[0].mxu0
      %v565 = vadd.f32 0.0, %v564
      %566 = vmatprep.mubr.f32.mxu0 0.0
      %567 = vmatmul.mubr.f32.gmra.mrb[0].mxu0 %v246
      %v568 = vpop.f32.mrb[0].mxu0
      %v569 = vadd.f32 0.0, %v568
      %v570 = vpop.f32.mrb[0].mxu0
      %v571 = vadd.f32 0.0, %v570
      %572 = vmatprep.mubr.f32.mxu0 0.0
      %573 = vmatmul.mubr.f32.gmra.mrb[0].mxu0 %v249
      %v574 = vpop.f32.mrb[0].mxu0
      %v575 = vadd.f32 0.0, %v574
      %v576 = vpop.f32.mrb[0].mxu0
      %v577 = vadd.f32 0.0, %v576
      %578 = vdwg.mxu0
      %579 = vmatprep.subr.mxu0 %v217
      %580 = vmatpush1.msra.mxu0 %v216
      %581 = vmatprep.subr.mxu0 %v274
      %582 = vmatpush1.msra.mxu0 %v271
      %583 = vmatprep.subr.mxu0 0.0
      %584 = vmatpush1.msra.mxu0 0.0
      %585 = vmatprep.subr.mxu0 0.0
      %586 = vmatpush1.msra.mxu0 0.0
      %587 = vmatprep.subr.mxu0 0.0
      %588 = vmatpush1.msra.mxu0 0.0
      %589 = vmatprep.subr.mxu0 0.0
      %590 = vmatpush1.msra.mxu0 0.0
      %591 = vmatprep.subr.mxu0 0.0
      %592 = vmatpush1.msra.mxu0 0.0
      %593 = vmatprep.subr.mxu0 0.0
      %594 = vmatpush1.msra.mxu0 0.0
      %595 = vmatprep.subr.mxu0 0.0
      %596 = vmatpush1.msra.mxu0 0.0
      %597 = vmatprep.subr.mxu0 0.0
      %598 = vmatpush1.msra.mxu0 0.0
      %599 = vmatprep.subr.mxu0 0.0
      %600 = vmatpush1.msra.mxu0 0.0
      %601 = vmatprep.subr.mxu0 0.0
      %602 = vmatpush1.msra.mxu0 0.0
      %603 = vmatprep.subr.mxu0 0.0
      %604 = vmatpush1.msra.mxu0 0.0
      %605 = vmatprep.subr.mxu0 0.0
      %606 = vmatpush1.msra.mxu0 0.0
      %607 = vmatprep.subr.mxu0 0.0
      %608 = vmatpush1.msra.mxu0 0.0
      %609 = vmatprep.subr.mxu0 0.0
      %610 = vmatpush1.msra.mxu0 0.0
      %611 = vmatprep.subr.mxu0 0.0
      %612 = vmatpush1.msra.mxu0 0.0
      %613 = vmatprep.subr.mxu0 0.0
      %614 = vmatpush1.msra.mxu0 0.0
      %615 = vmatprep.subr.mxu0 0.0
      %616 = vmatpush1.msra.mxu0 0.0
      %617 = vmatprep.subr.mxu0 0.0
      %618 = vmatpush1.msra.mxu0 0.0
      %619 = vmatprep.subr.mxu0 0.0
      %620 = vmatpush1.msra.mxu0 0.0
      %621 = vmatprep.subr.mxu0 0.0
      %622 = vmatpush1.msra.mxu0 0.0
      %623 = vmatprep.subr.mxu0 0.0
      %624 = vmatpush1.msra.mxu0 0.0
      %625 = vmatprep.subr.mxu0 0.0
      %626 = vmatpush1.msra.mxu0 0.0
      %627 = vmatprep.subr.mxu0 0.0
      %628 = vmatpush1.msra.mxu0 0.0
      %629 = vmatprep.subr.mxu0 0.0
      %630 = vmatpush1.msra.mxu0 0.0
      %631 = vmatprep.subr.mxu0 0.0
      %632 = vmatpush1.msra.mxu0 0.0
      %633 = vmatprep.subr.mxu0 0.0
      %634 = vmatpush1.msra.mxu0 0.0
      %635 = vmatprep.subr.mxu0 0.0
      %636 = vmatpush1.msra.mxu0 0.0
      %637 = vmatprep.subr.mxu0 0.0
      %638 = vmatpush1.msra.mxu0 0.0
      %639 = vmatprep.subr.mxu0 0.0
      %640 = vmatpush1.msra.mxu0 0.0
      %641 = vmatprep.subr.mxu0 0.0
      %642 = vmatpush1.msra.mxu0 0.0
      %643 = vmatprep.mubr.f32.mxu0 0.0
      %644 = vmatmul.mubr.f32.gmra.mrb[0].mxu0 %v234
      %v645 = vpop.f32.mrb[0].mxu0
      %v646 = vadd.f32 0.0, %v645
      %v647 = vpop.f32.mrb[0].mxu0
      %v648 = vadd.f32 0.0, %v647
      %649 = vmatprep.mubr.f32.mxu0 0.0
      %650 = vmatmul.mubr.f32.gmra.mrb[0].mxu0 %v237
      %v651 = vpop.f32.mrb[0].mxu0
      %v652 = vadd.f32 0.0, %v651
      %v653 = vpop.f32.mrb[0].mxu0
      %v654 = vadd.f32 0.0, %v653
      %655 = vmatprep.mubr.f32.mxu0 0.0
      %656 = vmatmul.mubr.f32.gmra.mrb[0].mxu0 %v240
      %v657 = vpop.f32.mrb[0].mxu0
      %v658 = vadd.f32 0.0, %v657
      %v659 = vpop.f32.mrb[0].mxu0
      %v660 = vadd.f32 0.0, %v659
      %661 = vmatprep.mubr.f32.mxu0 0.0
      %662 = vmatmul.mubr.f32.gmra.mrb[0].mxu0 %v243
      %v663 = vpop.f32.mrb[0].mxu0
      %v664 = vadd.f32 0.0, %v663
      %v665 = vpop.f32.mrb[0].mxu0
      %v666 = vadd.f32 0.0, %v665
      %667 = vmatprep.mubr.f32.mxu0 0.0
      %668 = vmatmul.mubr.f32.gmra.mrb[0].mxu0 %v246
      %v669 = vpop.f32.mrb[0].mxu0
      %v670 = vadd.f32 0.0, %v669
      %v671 = vpop.f32.mrb[0].mxu0
      %v672 = vadd.f32 0.0, %v671
      %673 = vmatprep.mubr.f32.mxu0 0.0
      %674 = vmatmul.mubr.f32.gmra.mrb[0].mxu0 %v249
      %v675 = vpop.f32.mrb[0].mxu0
      %v676 = vadd.f32 0.0, %v675
      %v677 = vpop.f32.mrb[0].mxu0
      %v678 = vadd.f32 0.0, %v677
      %679 = vdwg.mxu0
      %v680 = vld [vmem:[%s2] sm:$0xff]
      %s681 = scalar_lea.vmem %s2, 8
      %v682 = vld [vmem:[%s681] sm:$0xff]
      %v683 = vmul.f32 %v343, %v343
      %v684 = vmul.f32 %v345, %v345
      %v685 = vmul.f32 %v444, %v444
      %v686 = vmul.f32 %v446, %v446
      %v687 = vmul.f32 %v545, %v545
      %v688 = vmul.f32 %v547, %v547
      %v689 = vmul.f32 %v646, %v646
      %v690 = vmul.f32 %v648, %v648
      %v691 = vmul.f32 %v349, %v349
      %v692 = vmul.f32 %v351, %v351
      %v693 = vmul.f32 %v450, %v450
      %v694 = vmul.f32 %v452, %v452
      %v695 = vmul.f32 %v551, %v551
      %v696 = vmul.f32 %v553, %v553
      %v697 = vmul.f32 %v652, %v652
      %v698 = vmul.f32 %v654, %v654
      %v699 = vadd.f32 %v683, %v691
      %v700 = vadd.f32 %v684, %v692
      %v701 = vadd.f32 %v685, %v693
      %v702 = vadd.f32 %v686, %v694
      %v703 = vadd.f32 %v687, %v695
      %v704 = vadd.f32 %v688, %v696
      %v705 = vadd.f32 %v689, %v697
      %v706 = vadd.f32 %v690, %v698
      %v707 = vmul.f32 %v355, %v355
      %v708 = vmul.f32 %v357, %v357
      %v709 = vmul.f32 %v456, %v456
      %v710 = vmul.f32 %v458, %v458
      %v711 = vmul.f32 %v557, %v557
      %v712 = vmul.f32 %v559, %v559
      %v713 = vmul.f32 %v658, %v658
      %v714 = vmul.f32 %v660, %v660
      %v715 = vadd.f32 %v699, %v707
      %v716 = vadd.f32 %v700, %v708
      %v717 = vadd.f32 %v701, %v709
      %v718 = vadd.f32 %v702, %v710
      %v719 = vadd.f32 %v703, %v711
      %v720 = vadd.f32 %v704, %v712
      %v721 = vadd.f32 %v705, %v713
      %v722 = vadd.f32 %v706, %v714
      %v723 = vrsqrt.pop %v715
      %v724 = vmul.f32 %v715, %v723
      %vm725 = vcmp.eq.f32.partialorder %v715, inf
      %v726 = vsel %vm725, %v715, %v724
      %vm727 = vcmp.eq.f32.partialorder %v715, 0.0
      %v728 = vand.u32 %v715, 2147483648
      %v729 = vsel %vm727, %v728, %v726
      %v730 = vrsqrt.pop %v716
      %v731 = vmul.f32 %v716, %v730
      %vm732 = vcmp.eq.f32.partialorder %v716, inf
      %v733 = vsel %vm732, %v716, %v731
      %vm734 = vcmp.eq.f32.partialorder %v716, 0.0
      %v735 = vand.u32 %v716, 2147483648
      %v736 = vsel %vm734, %v735, %v733
      %v737 = vrsqrt.pop %v717
      %v738 = vmul.f32 %v717, %v737
      %vm739 = vcmp.eq.f32.partialorder %v717, inf
      %v740 = vsel %vm739, %v717, %v738
      %vm741 = vcmp.eq.f32.partialorder %v717, 0.0
      %v742 = vand.u32 %v717, 2147483648
      %v743 = vsel %vm741, %v742, %v740
      %v744 = vrsqrt.pop %v718
      %v745 = vmul.f32 %v718, %v744
      %vm746 = vcmp.eq.f32.partialorder %v718, inf
      %v747 = vsel %vm746, %v718, %v745
      %vm748 = vcmp.eq.f32.partialorder %v718, 0.0
      %v749 = vand.u32 %v718, 2147483648
      %v750 = vsel %vm748, %v749, %v747
      %v751 = vrsqrt.pop %v719
      %v752 = vmul.f32 %v719, %v751
      %vm753 = vcmp.eq.f32.partialorder %v719, inf
      %v754 = vsel %vm753, %v719, %v752
      %vm755 = vcmp.eq.f32.partialorder %v719, 0.0
      %v756 = vand.u32 %v719, 2147483648
      %v757 = vsel %vm755, %v756, %v754
      %v758 = vrsqrt.pop %v720
      %v759 = vmul.f32 %v720, %v758
      %vm760 = vcmp.eq.f32.partialorder %v720, inf
      %v761 = vsel %vm760, %v720, %v759
      %vm762 = vcmp.eq.f32.partialorder %v720, 0.0
      %v763 = vand.u32 %v720, 2147483648
      %v764 = vsel %vm762, %v763, %v761
      %v765 = vrsqrt.pop %v721
      %v766 = vmul.f32 %v721, %v765
      %vm767 = vcmp.eq.f32.partialorder %v721, inf
      %v768 = vsel %vm767, %v721, %v766
      %vm769 = vcmp.eq.f32.partialorder %v721, 0.0
      %v770 = vand.u32 %v721, 2147483648
      %v771 = vsel %vm769, %v770, %v768
      %v772 = vrsqrt.pop %v722
      %v773 = vmul.f32 %v722, %v772
      %vm774 = vcmp.eq.f32.partialorder %v722, inf
      %v775 = vsel %vm774, %v722, %v773
      %vm776 = vcmp.eq.f32.partialorder %v722, 0.0
      %v777 = vand.u32 %v722, 2147483648
      %v778 = vsel %vm776, %v777, %v775
      %v779 = vadd.f32 %v729, 1e-12
      %v780 = vadd.f32 %v736, 1e-12
      %v781 = vadd.f32 %v743, 1e-12
      %v782 = vadd.f32 %v750, 1e-12
      %v783 = vadd.f32 %v757, 1e-12
      %v784 = vadd.f32 %v764, 1e-12
      %v785 = vadd.f32 %v771, 1e-12
      %v786 = vadd.f32 %v778, 1e-12
      %788 = vset.pattern.permute.xlu0 0
      %789 = vperm.xlu0 %788, %v682
      %v790 = vpop.permute.xlu0 %789
      %v792 = vrcp.pop %v779
      %v793 = vmul.f32 %v790, %v792
      %v794 = vrcp.pop %v780
      %v795 = vmul.f32 %v790, %v794
      %v796 = vrcp.pop %v781
      %v797 = vmul.f32 %v790, %v796
      %v798 = vrcp.pop %v782
      %v799 = vmul.f32 %v790, %v798
      %v800 = vrcp.pop %v783
      %v801 = vmul.f32 %v790, %v800
      %v802 = vrcp.pop %v784
      %v803 = vmul.f32 %v790, %v802
      %v804 = vrcp.pop %v785
      %v805 = vmul.f32 %v790, %v804
      %v806 = vrcp.pop %v786
      %v807 = vmul.f32 %v790, %v806
      %809 = vset.pattern.permute.xlu0 0
      %810 = vperm.xlu0 %809, %v680
      %v811 = vpop.permute.xlu0 %810
      %v813 = vsub.f32 %v811, %v793
      %v814 = vsub.f32 %v811, %v795
      %v815 = vsub.f32 %v811, %v797
      %v816 = vsub.f32 %v811, %v799
      %v817 = vsub.f32 %v811, %v801
      %v818 = vsub.f32 %v811, %v803
      %v819 = vsub.f32 %v811, %v805
      %v820 = vsub.f32 %v811, %v807
      %v821 = vmul.f32 %v343, %v813
      %v822 = vmul.f32 %v345, %v814
      %v823 = vmul.f32 %v444, %v815
      %v824 = vmul.f32 %v446, %v816
      %v825 = vmul.f32 %v545, %v817
      %v826 = vmul.f32 %v547, %v818
      %v827 = vmul.f32 %v646, %v819
      %v828 = vmul.f32 %v648, %v820
      %v829 = vmul.f32 %v349, %v813
      %v830 = vmul.f32 %v351, %v814
      %v831 = vmul.f32 %v450, %v815
      %v832 = vmul.f32 %v452, %v816
      %v833 = vmul.f32 %v551, %v817
      %v834 = vmul.f32 %v553, %v818
      %v835 = vmul.f32 %v652, %v819
      %v836 = vmul.f32 %v654, %v820
      %v837 = vmul.f32 %v355, %v813
      %v838 = vmul.f32 %v357, %v814
      %v839 = vmul.f32 %v456, %v815
      %v840 = vmul.f32 %v458, %v816
      %v841 = vmul.f32 %v557, %v817
      %v842 = vmul.f32 %v559, %v818
      %v843 = vmul.f32 %v658, %v819
      %v844 = vmul.f32 %v660, %v820
      %v845 = vmul.f32 %v821, %v361
      %v846 = vmul.f32 %v822, %v363
      %v847 = vmul.f32 %v823, %v462
      %v848 = vmul.f32 %v824, %v464
      %v849 = vmul.f32 %v825, %v563
      %v850 = vmul.f32 %v826, %v565
      %v851 = vmul.f32 %v827, %v664
      %v852 = vmul.f32 %v828, %v666
      %v853 = vmul.f32 %v829, %v367
      %v854 = vmul.f32 %v830, %v369
      %v855 = vmul.f32 %v831, %v468
      %v856 = vmul.f32 %v832, %v470
      %v857 = vmul.f32 %v833, %v569
      %v858 = vmul.f32 %v834, %v571
      %v859 = vmul.f32 %v835, %v670
      %v860 = vmul.f32 %v836, %v672
      %v861 = vadd.f32 %v845, %v853
      %v862 = vadd.f32 %v846, %v854
      %v863 = vadd.f32 %v847, %v855
      %v864 = vadd.f32 %v848, %v856
      %v865 = vadd.f32 %v849, %v857
      %v866 = vadd.f32 %v850, %v858
      %v867 = vadd.f32 %v851, %v859
      %v868 = vadd.f32 %v852, %v860
      %v869 = vmul.f32 %v837, %v373
      %v870 = vmul.f32 %v838, %v375
      %v871 = vmul.f32 %v839, %v474
      %v872 = vmul.f32 %v840, %v476
      %v873 = vmul.f32 %v841, %v575
      %v874 = vmul.f32 %v842, %v577
      %v875 = vmul.f32 %v843, %v676
      %v876 = vmul.f32 %v844, %v678
      %v877 = vadd.f32 %v861, %v869
      %v878 = vadd.f32 %v862, %v870
      %v879 = vadd.f32 %v863, %v871
      %v880 = vadd.f32 %v864, %v872
      %v881 = vadd.f32 %v865, %v873
      %v882 = vadd.f32 %v866, %v874
      %v883 = vadd.f32 %v867, %v875
      %v884 = vadd.f32 %v868, %v876
      %v885 = vmul.f32 %v361, %v361
      %v886 = vmul.f32 %v363, %v363
      %v887 = vmul.f32 %v462, %v462
      %v888 = vmul.f32 %v464, %v464
      %v889 = vmul.f32 %v563, %v563
      %v890 = vmul.f32 %v565, %v565
      %v891 = vmul.f32 %v664, %v664
      %v892 = vmul.f32 %v666, %v666
      %v893 = vmul.f32 %v367, %v367
      %v894 = vmul.f32 %v369, %v369
      %v895 = vmul.f32 %v468, %v468
      %v896 = vmul.f32 %v470, %v470
      %v897 = vmul.f32 %v569, %v569
      %v898 = vmul.f32 %v571, %v571
      %v899 = vmul.f32 %v670, %v670
      %v900 = vmul.f32 %v672, %v672
      %v901 = vadd.f32 %v885, %v893
      %v902 = vadd.f32 %v886, %v894
      %v903 = vadd.f32 %v887, %v895
      %v904 = vadd.f32 %v888, %v896
      %v905 = vadd.f32 %v889, %v897
      %v906 = vadd.f32 %v890, %v898
      %v907 = vadd.f32 %v891, %v899
      %v908 = vadd.f32 %v892, %v900
      %v909 = vmul.f32 %v373, %v373
      %v910 = vmul.f32 %v375, %v375
      %v911 = vmul.f32 %v474, %v474
      %v912 = vmul.f32 %v476, %v476
      %v913 = vmul.f32 %v575, %v575
      %v914 = vmul.f32 %v577, %v577
      %v915 = vmul.f32 %v676, %v676
      %v916 = vmul.f32 %v678, %v678
      %v917 = vadd.f32 %v901, %v909
      %v918 = vadd.f32 %v902, %v910
      %v919 = vadd.f32 %v903, %v911
      %v920 = vadd.f32 %v904, %v912
      %v921 = vadd.f32 %v905, %v913
      %v922 = vadd.f32 %v906, %v914
      %v923 = vadd.f32 %v907, %v915
      %v924 = vadd.f32 %v908, %v916
      %v925 = vadd.f32 %v917, 1e-12
      %v926 = vadd.f32 %v918, 1e-12
      %v927 = vadd.f32 %v919, 1e-12
      %v928 = vadd.f32 %v920, 1e-12
      %v929 = vadd.f32 %v921, 1e-12
      %v930 = vadd.f32 %v922, 1e-12
      %v931 = vadd.f32 %v923, 1e-12
      %v932 = vadd.f32 %v924, 1e-12
      %v933 = vrcp.pop %v925
      %v934 = vmul.f32 %v877, %v933
      %v935 = vrcp.pop %v926
      %v936 = vmul.f32 %v878, %v935
      %v937 = vrcp.pop %v927
      %v938 = vmul.f32 %v879, %v937
      %v939 = vrcp.pop %v928
      %v940 = vmul.f32 %v880, %v939
      %v941 = vrcp.pop %v929
      %v942 = vmul.f32 %v881, %v941
      %v943 = vrcp.pop %v930
      %v944 = vmul.f32 %v882, %v943
      %v945 = vrcp.pop %v931
      %v946 = vmul.f32 %v883, %v945
      %v947 = vrcp.pop %v932
      %v948 = vmul.f32 %v884, %v947
      %v949 = vmin.f32 %v934, 0.0
      %v950 = vmin.f32 %v936, 0.0
      %v951 = vmin.f32 %v938, 0.0
      %v952 = vmin.f32 %v940, 0.0
      %v953 = vmin.f32 %v942, 0.0
      %v954 = vmin.f32 %v944, 0.0
      %v955 = vmin.f32 %v946, 0.0
      %v956 = vmin.f32 %v948, 0.0
      %v957 = vmul.f32 %v949, 0.8
      %v958 = vmul.f32 %v950, 0.8
      %v959 = vmul.f32 %v951, 0.8
      %v960 = vmul.f32 %v952, 0.8
      %v961 = vmul.f32 %v953, 0.8
      %v962 = vmul.f32 %v954, 0.8
      %v963 = vmul.f32 %v955, 0.8
      %v964 = vmul.f32 %v956, 0.8
      %v965 = vmul.f32 %v957, %v361
      %v966 = vmul.f32 %v958, %v363
      %v967 = vmul.f32 %v959, %v462
      %v968 = vmul.f32 %v960, %v464
      %v969 = vmul.f32 %v961, %v563
      %v970 = vmul.f32 %v962, %v565
      %v971 = vmul.f32 %v963, %v664
      %v972 = vmul.f32 %v964, %v666
      %v973 = vsub.f32 %v821, %v965
      %v974 = vsub.f32 %v822, %v966
      %v975 = vsub.f32 %v823, %v967
      %v976 = vsub.f32 %v824, %v968
      %v977 = vsub.f32 %v825, %v969
      %v978 = vsub.f32 %v826, %v970
      %v979 = vsub.f32 %v827, %v971
      %v980 = vsub.f32 %v828, %v972
      %v989 = vcombine.low %v973, %v974
      %v990 = vcombine.high %v973, %v974
      %v991 = vcombine.low %v975, %v976
      %v992 = vcombine.high %v975, %v976
      %v993 = vcombine.low %v977, %v978
      %v994 = vcombine.high %v977, %v978
      %v995 = vcombine.low %v979, %v980
      %v996 = vcombine.high %v979, %v980
      %v998 = vunpack.c.l.s4 1966171168
      %v999 = vunpack.c.0.s8 %v998
      %v1000 = vlaneseq
      %v1001 = vshrl.u32 %v1000, 7
      %v1002 = vsub.s32 %v999, %v1001
      %v1003 = vrot.slane %v989, %v1002
      %v1005 = vunpack.c.l.s4 1966171168
      %v1006 = vunpack.c.0.s8 %v1005
      %v1007 = vlaneseq
      %v1008 = vshrl.u32 %v1007, 7
      %v1009 = vsub.s32 %v1006, %v1008
      %v1010 = vrot.slane %v990, %v1009
      %v1012 = vunpack.c.l.s4 1966171168
      %v1013 = vunpack.c.0.s8 %v1012
      %v1014 = vlaneseq
      %v1015 = vshrl.u32 %v1014, 7
      %v1016 = vsub.s32 %v1013, %v1015
      %v1017 = vrot.slane %v991, %v1016
      %v1019 = vunpack.c.l.s4 1966171168
      %v1020 = vunpack.c.0.s8 %v1019
      %v1021 = vlaneseq
      %v1022 = vshrl.u32 %v1021, 7
      %v1023 = vsub.s32 %v1020, %v1022
      %v1024 = vrot.slane %v992, %v1023
      %v1026 = vunpack.c.l.s4 1966171168
      %v1027 = vunpack.c.0.s8 %v1026
      %v1028 = vlaneseq
      %v1029 = vshrl.u32 %v1028, 7
      %v1030 = vsub.s32 %v1027, %v1029
      %v1031 = vrot.slane %v993, %v1030
      %v1033 = vunpack.c.l.s4 1966171168
      %v1034 = vunpack.c.0.s8 %v1033
      %v1035 = vlaneseq
      %v1036 = vshrl.u32 %v1035, 7
      %v1037 = vsub.s32 %v1034, %v1036
      %v1038 = vrot.slane %v994, %v1037
      %v1040 = vunpack.c.l.s4 1966171168
      %v1041 = vunpack.c.0.s8 %v1040
      %v1042 = vlaneseq
      %v1043 = vshrl.u32 %v1042, 7
      %v1044 = vsub.s32 %v1041, %v1043
      %v1045 = vrot.slane %v995, %v1044
      %v1047 = vunpack.c.l.s4 1966171168
      %v1048 = vunpack.c.0.s8 %v1047
      %v1049 = vlaneseq
      %v1050 = vshrl.u32 %v1049, 7
      %v1051 = vsub.s32 %v1048, %v1050
      %v1052 = vrot.slane %v996, %v1051
      %v1053 = vcombine.low %v1003, %v1017
      %v1054 = vcombine.high %v1003, %v1017
      %v1055 = vcombine.low %v1010, %v1024
      %v1056 = vcombine.high %v1010, %v1024
      %v1057 = vcombine.low %v1031, %v1045
      %v1058 = vcombine.high %v1031, %v1045
      %v1059 = vcombine.low %v1038, %v1052
      %v1060 = vcombine.high %v1038, %v1052
      %v1062 = vunpack.c.l.s4 1966171168
      %v1063 = vunpack.c.0.s8 %v1062
      %v1064 = vlaneseq
      %v1065 = vshrl.u32 %v1064, 7
      %v1066 = vsub.s32 %v1063, %v1065
      %v1067 = vrot.slane %v1053, %v1066
      %v1069 = vunpack.c.l.s4 1966171168
      %v1070 = vunpack.c.0.s8 %v1069
      %v1071 = vlaneseq
      %v1072 = vshrl.u32 %v1071, 7
      %v1073 = vsub.s32 %v1070, %v1072
      %v1074 = vrot.slane %v1055, %v1073
      %v1076 = vunpack.c.l.s4 1966171168
      %v1077 = vunpack.c.0.s8 %v1076
      %v1078 = vlaneseq
      %v1079 = vshrl.u32 %v1078, 7
      %v1080 = vsub.s32 %v1077, %v1079
      %v1081 = vrot.slane %v1054, %v1080
      %v1083 = vunpack.c.l.s4 1966171168
      %v1084 = vunpack.c.0.s8 %v1083
      %v1085 = vlaneseq
      %v1086 = vshrl.u32 %v1085, 7
      %v1087 = vsub.s32 %v1084, %v1086
      %v1088 = vrot.slane %v1056, %v1087
      %v1090 = vunpack.c.l.s4 1966171168
      %v1091 = vunpack.c.0.s8 %v1090
      %v1092 = vlaneseq
      %v1093 = vshrl.u32 %v1092, 7
      %v1094 = vsub.s32 %v1091, %v1093
      %v1095 = vrot.slane %v1057, %v1094
      %v1097 = vunpack.c.l.s4 1966171168
      %v1098 = vunpack.c.0.s8 %v1097
      %v1099 = vlaneseq
      %v1100 = vshrl.u32 %v1099, 7
      %v1101 = vsub.s32 %v1098, %v1100
      %v1102 = vrot.slane %v1059, %v1101
      %v1104 = vunpack.c.l.s4 1966171168
      %v1105 = vunpack.c.0.s8 %v1104
      %v1106 = vlaneseq
      %v1107 = vshrl.u32 %v1106, 7
      %v1108 = vsub.s32 %v1105, %v1107
      %v1109 = vrot.slane %v1058, %v1108
      %v1111 = vunpack.c.l.s4 1966171168
      %v1112 = vunpack.c.0.s8 %v1111
      %v1113 = vlaneseq
      %v1114 = vshrl.u32 %v1113, 7
      %v1115 = vsub.s32 %v1112, %v1114
      %v1116 = vrot.slane %v1060, %v1115
      %v1117 = vcombine.low %v1067, %v1095
      %v1118 = vcombine.high %v1067, %v1095
      %v1119 = vcombine.low %v1074, %v1102
      %v1120 = vcombine.high %v1074, %v1102
      %v1121 = vcombine.low %v1081, %v1109
      %v1122 = vcombine.high %v1081, %v1109
      %v1123 = vcombine.low %v1088, %v1116
      %v1124 = vcombine.high %v1088, %v1116
      %1133 = vst [vmem:[%s208] ss:$4 sm:$0xff] %v1117
      %s1134 = scalar_lea.vmem %s208, 32
      %1135 = vst [vmem:[%s1134] ss:$4 sm:$0xff] %v1121
      %s1136 = scalar_lea.vmem %s208, 64
      %1137 = vst [vmem:[%s1136] ss:$4 sm:$0xff] %v1118
      %s1138 = scalar_lea.vmem %s208, 96
      %1139 = vst [vmem:[%s1138] ss:$4 sm:$0xff] %v1122
      %s1140 = scalar_lea.vmem %s208, 128
      %1141 = vst [vmem:[%s1140] ss:$4 sm:$0xff] %v1119
      %s1142 = scalar_lea.vmem %s208, 160
      %1143 = vst [vmem:[%s1142] ss:$4 sm:$0xff] %v1123
      %s1144 = scalar_lea.vmem %s208, 192
      %1145 = vst [vmem:[%s1144] ss:$4 sm:$0xff] %v1120
      %s1146 = scalar_lea.vmem %s208, 224
      %1147 = vst [vmem:[%s1146] ss:$4 sm:$0xff] %v1124
      %v1148 = vmul.f32 %v957, %v367
      %v1149 = vmul.f32 %v958, %v369
      %v1150 = vmul.f32 %v959, %v468
      %v1151 = vmul.f32 %v960, %v470
      %v1152 = vmul.f32 %v961, %v569
      %v1153 = vmul.f32 %v962, %v571
      %v1154 = vmul.f32 %v963, %v670
      %v1155 = vmul.f32 %v964, %v672
      %v1156 = vsub.f32 %v829, %v1148
      %v1157 = vsub.f32 %v830, %v1149
      %v1158 = vsub.f32 %v831, %v1150
      %v1159 = vsub.f32 %v832, %v1151
      %v1160 = vsub.f32 %v833, %v1152
      %v1161 = vsub.f32 %v834, %v1153
      %v1162 = vsub.f32 %v835, %v1154
      %v1163 = vsub.f32 %v836, %v1155
      %v1172 = vcombine.low %v1156, %v1157
      %v1173 = vcombine.high %v1156, %v1157
      %v1174 = vcombine.low %v1158, %v1159
      %v1175 = vcombine.high %v1158, %v1159
      %v1176 = vcombine.low %v1160, %v1161
      %v1177 = vcombine.high %v1160, %v1161
      %v1178 = vcombine.low %v1162, %v1163
      %v1179 = vcombine.high %v1162, %v1163
      %v1181 = vunpack.c.l.s4 1966171168
      %v1182 = vunpack.c.0.s8 %v1181
      %v1183 = vlaneseq
      %v1184 = vshrl.u32 %v1183, 7
      %v1185 = vsub.s32 %v1182, %v1184
      %v1186 = vrot.slane %v1172, %v1185
      %v1188 = vunpack.c.l.s4 1966171168
      %v1189 = vunpack.c.0.s8 %v1188
      %v1190 = vlaneseq
      %v1191 = vshrl.u32 %v1190, 7
      %v1192 = vsub.s32 %v1189, %v1191
      %v1193 = vrot.slane %v1173, %v1192
      %v1195 = vunpack.c.l.s4 1966171168
      %v1196 = vunpack.c.0.s8 %v1195
      %v1197 = vlaneseq
      %v1198 = vshrl.u32 %v1197, 7
      %v1199 = vsub.s32 %v1196, %v1198
      %v1200 = vrot.slane %v1174, %v1199
      %v1202 = vunpack.c.l.s4 1966171168
      %v1203 = vunpack.c.0.s8 %v1202
      %v1204 = vlaneseq
      %v1205 = vshrl.u32 %v1204, 7
      %v1206 = vsub.s32 %v1203, %v1205
      %v1207 = vrot.slane %v1175, %v1206
      %v1209 = vunpack.c.l.s4 1966171168
      %v1210 = vunpack.c.0.s8 %v1209
      %v1211 = vlaneseq
      %v1212 = vshrl.u32 %v1211, 7
      %v1213 = vsub.s32 %v1210, %v1212
      %v1214 = vrot.slane %v1176, %v1213
      %v1216 = vunpack.c.l.s4 1966171168
      %v1217 = vunpack.c.0.s8 %v1216
      %v1218 = vlaneseq
      %v1219 = vshrl.u32 %v1218, 7
      %v1220 = vsub.s32 %v1217, %v1219
      %v1221 = vrot.slane %v1177, %v1220
      %v1223 = vunpack.c.l.s4 1966171168
      %v1224 = vunpack.c.0.s8 %v1223
      %v1225 = vlaneseq
      %v1226 = vshrl.u32 %v1225, 7
      %v1227 = vsub.s32 %v1224, %v1226
      %v1228 = vrot.slane %v1178, %v1227
      %v1230 = vunpack.c.l.s4 1966171168
      %v1231 = vunpack.c.0.s8 %v1230
      %v1232 = vlaneseq
      %v1233 = vshrl.u32 %v1232, 7
      %v1234 = vsub.s32 %v1231, %v1233
      %v1235 = vrot.slane %v1179, %v1234
      %v1236 = vcombine.low %v1186, %v1200
      %v1237 = vcombine.high %v1186, %v1200
      %v1238 = vcombine.low %v1193, %v1207
      %v1239 = vcombine.high %v1193, %v1207
      %v1240 = vcombine.low %v1214, %v1228
      %v1241 = vcombine.high %v1214, %v1228
      %v1242 = vcombine.low %v1221, %v1235
      %v1243 = vcombine.high %v1221, %v1235
      %v1245 = vunpack.c.l.s4 1966171168
      %v1246 = vunpack.c.0.s8 %v1245
      %v1247 = vlaneseq
      %v1248 = vshrl.u32 %v1247, 7
      %v1249 = vsub.s32 %v1246, %v1248
      %v1250 = vrot.slane %v1236, %v1249
      %v1252 = vunpack.c.l.s4 1966171168
      %v1253 = vunpack.c.0.s8 %v1252
      %v1254 = vlaneseq
      %v1255 = vshrl.u32 %v1254, 7
      %v1256 = vsub.s32 %v1253, %v1255
      %v1257 = vrot.slane %v1238, %v1256
      %v1259 = vunpack.c.l.s4 1966171168
      %v1260 = vunpack.c.0.s8 %v1259
      %v1261 = vlaneseq
      %v1262 = vshrl.u32 %v1261, 7
      %v1263 = vsub.s32 %v1260, %v1262
      %v1264 = vrot.slane %v1237, %v1263
      %v1266 = vunpack.c.l.s4 1966171168
      %v1267 = vunpack.c.0.s8 %v1266
      %v1268 = vlaneseq
      %v1269 = vshrl.u32 %v1268, 7
      %v1270 = vsub.s32 %v1267, %v1269
      %v1271 = vrot.slane %v1239, %v1270
      %v1273 = vunpack.c.l.s4 1966171168
      %v1274 = vunpack.c.0.s8 %v1273
      %v1275 = vlaneseq
      %v1276 = vshrl.u32 %v1275, 7
      %v1277 = vsub.s32 %v1274, %v1276
      %v1278 = vrot.slane %v1240, %v1277
      %v1280 = vunpack.c.l.s4 1966171168
      %v1281 = vunpack.c.0.s8 %v1280
      %v1282 = vlaneseq
      %v1283 = vshrl.u32 %v1282, 7
      %v1284 = vsub.s32 %v1281, %v1283
      %v1285 = vrot.slane %v1242, %v1284
      %v1287 = vunpack.c.l.s4 1966171168
      %v1288 = vunpack.c.0.s8 %v1287
      %v1289 = vlaneseq
      %v1290 = vshrl.u32 %v1289, 7
      %v1291 = vsub.s32 %v1288, %v1290
      %v1292 = vrot.slane %v1241, %v1291
      %v1294 = vunpack.c.l.s4 1966171168
      %v1295 = vunpack.c.0.s8 %v1294
      %v1296 = vlaneseq
      %v1297 = vshrl.u32 %v1296, 7
      %v1298 = vsub.s32 %v1295, %v1297
      %v1299 = vrot.slane %v1243, %v1298
      %v1300 = vcombine.low %v1250, %v1278
      %v1301 = vcombine.high %v1250, %v1278
      %v1302 = vcombine.low %v1257, %v1285
      %v1303 = vcombine.high %v1257, %v1285
      %v1304 = vcombine.low %v1264, %v1292
      %v1305 = vcombine.high %v1264, %v1292
      %v1306 = vcombine.low %v1271, %v1299
      %v1307 = vcombine.high %v1271, %v1299
      %s1316 = scalar_lea.vmem %s208, 1
      %1317 = vst [vmem:[%s1316] ss:$4 sm:$0xff] %v1300
      %s1318 = scalar_lea.vmem %s208, 33
      %1319 = vst [vmem:[%s1318] ss:$4 sm:$0xff] %v1304
      %s1320 = scalar_lea.vmem %s208, 65
      %1321 = vst [vmem:[%s1320] ss:$4 sm:$0xff] %v1301
      %s1322 = scalar_lea.vmem %s208, 97
      %1323 = vst [vmem:[%s1322] ss:$4 sm:$0xff] %v1305
      %s1324 = scalar_lea.vmem %s208, 129
      %1325 = vst [vmem:[%s1324] ss:$4 sm:$0xff] %v1302
      %s1326 = scalar_lea.vmem %s208, 161
      %1327 = vst [vmem:[%s1326] ss:$4 sm:$0xff] %v1306
      %s1328 = scalar_lea.vmem %s208, 193
      %1329 = vst [vmem:[%s1328] ss:$4 sm:$0xff] %v1303
      %s1330 = scalar_lea.vmem %s208, 225
      %1331 = vst [vmem:[%s1330] ss:$4 sm:$0xff] %v1307
      %v1332 = vmul.f32 %v957, %v373
      %v1333 = vmul.f32 %v958, %v375
      %v1334 = vmul.f32 %v959, %v474
      %v1335 = vmul.f32 %v960, %v476
      %v1336 = vmul.f32 %v961, %v575
      %v1337 = vmul.f32 %v962, %v577
      %v1338 = vmul.f32 %v963, %v676
      %v1339 = vmul.f32 %v964, %v678
      %v1340 = vsub.f32 %v837, %v1332
      %v1341 = vsub.f32 %v838, %v1333
      %v1342 = vsub.f32 %v839, %v1334
      %v1343 = vsub.f32 %v840, %v1335
      %v1344 = vsub.f32 %v841, %v1336
      %v1345 = vsub.f32 %v842, %v1337
      %v1346 = vsub.f32 %v843, %v1338
      %v1347 = vsub.f32 %v844, %v1339
      %v1356 = vcombine.low %v1340, %v1341
      %v1357 = vcombine.high %v1340, %v1341
      %v1358 = vcombine.low %v1342, %v1343
      %v1359 = vcombine.high %v1342, %v1343
      %v1360 = vcombine.low %v1344, %v1345
      %v1361 = vcombine.high %v1344, %v1345
      %v1362 = vcombine.low %v1346, %v1347
      %v1363 = vcombine.high %v1346, %v1347
      %v1365 = vunpack.c.l.s4 1966171168
      %v1366 = vunpack.c.0.s8 %v1365
      %v1367 = vlaneseq
      %v1368 = vshrl.u32 %v1367, 7
      %v1369 = vsub.s32 %v1366, %v1368
      %v1370 = vrot.slane %v1356, %v1369
      %v1372 = vunpack.c.l.s4 1966171168
      %v1373 = vunpack.c.0.s8 %v1372
      %v1374 = vlaneseq
      %v1375 = vshrl.u32 %v1374, 7
      %v1376 = vsub.s32 %v1373, %v1375
      %v1377 = vrot.slane %v1357, %v1376
      %v1379 = vunpack.c.l.s4 1966171168
      %v1380 = vunpack.c.0.s8 %v1379
      %v1381 = vlaneseq
      %v1382 = vshrl.u32 %v1381, 7
      %v1383 = vsub.s32 %v1380, %v1382
      %v1384 = vrot.slane %v1358, %v1383
      %v1386 = vunpack.c.l.s4 1966171168
      %v1387 = vunpack.c.0.s8 %v1386
      %v1388 = vlaneseq
      %v1389 = vshrl.u32 %v1388, 7
      %v1390 = vsub.s32 %v1387, %v1389
      %v1391 = vrot.slane %v1359, %v1390
      %v1393 = vunpack.c.l.s4 1966171168
      %v1394 = vunpack.c.0.s8 %v1393
      %v1395 = vlaneseq
      %v1396 = vshrl.u32 %v1395, 7
      %v1397 = vsub.s32 %v1394, %v1396
      %v1398 = vrot.slane %v1360, %v1397
      %v1400 = vunpack.c.l.s4 1966171168
      %v1401 = vunpack.c.0.s8 %v1400
      %v1402 = vlaneseq
      %v1403 = vshrl.u32 %v1402, 7
      %v1404 = vsub.s32 %v1401, %v1403
      %v1405 = vrot.slane %v1361, %v1404
      %v1407 = vunpack.c.l.s4 1966171168
      %v1408 = vunpack.c.0.s8 %v1407
      %v1409 = vlaneseq
      %v1410 = vshrl.u32 %v1409, 7
      %v1411 = vsub.s32 %v1408, %v1410
      %v1412 = vrot.slane %v1362, %v1411
      %v1414 = vunpack.c.l.s4 1966171168
      %v1415 = vunpack.c.0.s8 %v1414
      %v1416 = vlaneseq
      %v1417 = vshrl.u32 %v1416, 7
      %v1418 = vsub.s32 %v1415, %v1417
      %v1419 = vrot.slane %v1363, %v1418
      %v1420 = vcombine.low %v1370, %v1384
      %v1421 = vcombine.high %v1370, %v1384
      %v1422 = vcombine.low %v1377, %v1391
      %v1423 = vcombine.high %v1377, %v1391
      %v1424 = vcombine.low %v1398, %v1412
      %v1425 = vcombine.high %v1398, %v1412
      %v1426 = vcombine.low %v1405, %v1419
      %v1427 = vcombine.high %v1405, %v1419
      %v1429 = vunpack.c.l.s4 1966171168
      %v1430 = vunpack.c.0.s8 %v1429
      %v1431 = vlaneseq
      %v1432 = vshrl.u32 %v1431, 7
      %v1433 = vsub.s32 %v1430, %v1432
      %v1434 = vrot.slane %v1420, %v1433
      %v1436 = vunpack.c.l.s4 1966171168
      %v1437 = vunpack.c.0.s8 %v1436
      %v1438 = vlaneseq
      %v1439 = vshrl.u32 %v1438, 7
      %v1440 = vsub.s32 %v1437, %v1439
      %v1441 = vrot.slane %v1422, %v1440
      %v1443 = vunpack.c.l.s4 1966171168
      %v1444 = vunpack.c.0.s8 %v1443
      %v1445 = vlaneseq
      %v1446 = vshrl.u32 %v1445, 7
      %v1447 = vsub.s32 %v1444, %v1446
      %v1448 = vrot.slane %v1421, %v1447
      %v1450 = vunpack.c.l.s4 1966171168
      %v1451 = vunpack.c.0.s8 %v1450
      %v1452 = vlaneseq
      %v1453 = vshrl.u32 %v1452, 7
      %v1454 = vsub.s32 %v1451, %v1453
      %v1455 = vrot.slane %v1423, %v1454
      %v1457 = vunpack.c.l.s4 1966171168
      %v1458 = vunpack.c.0.s8 %v1457
      %v1459 = vlaneseq
      %v1460 = vshrl.u32 %v1459, 7
      %v1461 = vsub.s32 %v1458, %v1460
      %v1462 = vrot.slane %v1424, %v1461
      %v1464 = vunpack.c.l.s4 1966171168
      %v1465 = vunpack.c.0.s8 %v1464
      %v1466 = vlaneseq
      %v1467 = vshrl.u32 %v1466, 7
      %v1468 = vsub.s32 %v1465, %v1467
      %v1469 = vrot.slane %v1426, %v1468
      %v1471 = vunpack.c.l.s4 1966171168
      %v1472 = vunpack.c.0.s8 %v1471
      %v1473 = vlaneseq
      %v1474 = vshrl.u32 %v1473, 7
      %v1475 = vsub.s32 %v1472, %v1474
      %v1476 = vrot.slane %v1425, %v1475
      %v1478 = vunpack.c.l.s4 1966171168
      %v1479 = vunpack.c.0.s8 %v1478
      %v1480 = vlaneseq
      %v1481 = vshrl.u32 %v1480, 7
      %v1482 = vsub.s32 %v1479, %v1481
      %v1483 = vrot.slane %v1427, %v1482
      %v1484 = vcombine.low %v1434, %v1462
      %v1485 = vcombine.high %v1434, %v1462
      %v1486 = vcombine.low %v1441, %v1469
      %v1487 = vcombine.high %v1441, %v1469
      %v1488 = vcombine.low %v1448, %v1476
      %v1489 = vcombine.high %v1448, %v1476
      %v1490 = vcombine.low %v1455, %v1483
      %v1491 = vcombine.high %v1455, %v1483
      %s1500 = scalar_lea.vmem %s208, 2
      %1501 = vst [vmem:[%s1500] ss:$4 sm:$0xff] %v1484
      %s1502 = scalar_lea.vmem %s208, 34
      %1503 = vst [vmem:[%s1502] ss:$4 sm:$0xff] %v1488
      %s1504 = scalar_lea.vmem %s208, 66
      %1505 = vst [vmem:[%s1504] ss:$4 sm:$0xff] %v1485
      %s1506 = scalar_lea.vmem %s208, 98
      %1507 = vst [vmem:[%s1506] ss:$4 sm:$0xff] %v1489
      %s1508 = scalar_lea.vmem %s208, 130
      %1509 = vst [vmem:[%s1508] ss:$4 sm:$0xff] %v1486
      %s1510 = scalar_lea.vmem %s208, 162
      %1511 = vst [vmem:[%s1510] ss:$4 sm:$0xff] %v1490
      %s1512 = scalar_lea.vmem %s208, 194
      %1513 = vst [vmem:[%s1512] ss:$4 sm:$0xff] %v1487
      %s1514 = scalar_lea.vmem %s208, 226
      %1515 = vst [vmem:[%s1514] ss:$4 sm:$0xff] %v1491
      %s1516 = smul.u32 8, %s19
      %p1517 = scmp.lt.s32.totalorder %s18, 1
      %s1518 = scalar_select %p1517, %s18, 1
      %p1519 = scmp.lt.s32.totalorder %s1516, 7
      %s1520 = scalar_select %p1519, %s1516, 7
      %s1521 = smul.addr %s1518, 64
      %s1522 = sadd.s32 %s1520, %s1521
      %s1523 = smul.addr %s1522, 4
      %s1524 = scalar_lea.vmem %s3, %s1523
      // Predicated region
      $region33: #{vn_linear_leakyrelu.3} parent=31 // pred_check
        %p1525 = pneg %p116
      $region34: #{vn_linear_leakyrelu.3} parent=31 // pred_check_branch
        %1527 = sbr.rel (%p1525) target = $region36
      $region35: #{vn_linear_leakyrelu.3} parent=31 // pred_region
        %s1528 = smul.u32 8, %s19
      $region36: #{vn_linear_leakyrelu.3} parent=31 // pred_fallthru
        _
    $region32: #{vn_linear_leakyrelu.3} parent=5 // pred_fallthru
      _
    %p1529 = scmp.le.s32.totalorder 2, %s9
    // Predicated region
    $region37: #{vn_linear_leakyrelu.3} parent=5 // pred_check
      %p1530 = pneg %p1529
    $region38: #{vn_linear_leakyrelu.3} parent=5 // pred_check_branch
      %1532 = sbr.rel (%p1530) target = $region40
    $region39: #{vn_linear_leakyrelu.3} parent=5 // pred_region
      %s1533 = ssub.s32 %s9, 2
      // Predicated region
      $region41: #{vn_linear_leakyrelu.3} parent=39 // pred_check
        %p1534 = pneg %p122
      $region42: #{vn_linear_leakyrelu.3} parent=39 // pred_check_branch
        %1536 = sbr.rel (%p1534) target = $region44
      $region43: #{vn_linear_leakyrelu.3} parent=39 // pred_region
        %s1537 = smul.u32 8, %s21
        %p1538 = scmp.lt.s32.totalorder %s20, 1
        %s1539 = scalar_select %p1538, %s20, 1
        %p1540 = scmp.lt.s32.totalorder %s1537, 7
        %s1541 = scalar_select %p1540, %s1537, 7
        %s1542 = smul.addr %s1539, 64
        %s1543 = sadd.s32 %s1541, %s1542
        %s1544 = smul.addr %s1543, 4
        %s1545 = scalar_lea.vmem %s3, %s1544
      $region44: #{vn_linear_leakyrelu.3} parent=39 // pred_fallthru
        _
    $region40: #{vn_linear_leakyrelu.3} parent=5 // pred_fallthru
      _
  $region6: #{vn_linear_leakyrelu.3} parent=0 // loop_footer
    %s13 = sadd.s32 1, %s9
  $region7: #{vn_linear_leakyrelu.3} parent=0 // loop_footer_branch
    %8 = sbr.rel target = $region3
  $region8: #{vn_linear_leakyrelu.3} parent=0 // loop_exit
    _

</llo_original>
